<compile_context>
chip_gen: v6e
topology: v6e:2x2x1
jax: 0.10.0
libtpu: 0.0.40
codegen_flags: <defaults>
</compile_context>

<pallas_src>
import functools

import jax
import jax.numpy as jnp
from jax.experimental import pallas as pl
from jax.experimental.pallas import tpu as pltpu

BN_EPS = 1e-5


def relation_forward_kernel(p1_ref, w1_ref, b1_ref, g1_ref, be1_ref,
                            t2_ref, b2_ref, g2_ref, be2_ref,
                            w3_ref, b3_ref, w4_ref, b4_ref,
                            out_ref, *, n_batch):
    # ---------------- layer1: conv1 as one K=576 matmul ----------------
    # p1_ref: (25N, 576) im2col patches, rows ordered (h*5+w)*N + n
    z = jnp.dot(p1_ref[...], w1_ref[...], preferred_element_type=jnp.float32)
    z = z + b1_ref[...]                                         # (25N, 64)
    rows = float(z.shape[0])                                    # N * 5 * 5

    # training-mode BatchNorm2d(64): exact two-pass batch statistics (biased variance)
    mean1 = jnp.sum(z, axis=0, keepdims=True) / rows            # (1, 64)
    d1 = z - mean1
    var1 = jnp.sum(d1 * d1, axis=0, keepdims=True) / rows       # (1, 64)
    scale1 = g1_ref[...] * jax.lax.rsqrt(var1 + BN_EPS)
    shift1 = be1_ref[...] - mean1 * scale1
    a1 = jnp.maximum(z * scale1 + shift1, 0.0)                  # ReLU, (25N, 64)

    # ---------------- MaxPool2d(kernel=2, padding=1): 5x5 -> 3x3 ----------------
    # rows of one spatial site are contiguous: site s occupies rows [s*N, (s+1)*N)
    def site(s):
        return a1[s * n_batch:(s + 1) * n_batch, :]             # (N, 64)

    win1 = [(0,), (1, 2), (3, 4)]                               # valid rows/cols per window
    pooled1 = []                                                # q = i*3+j -> (N, 64)
    for i in range(3):
        for j in range(3):
            blocks = [site(hi * 5 + wj) for hi in win1[i] for wj in win1[j]]
            m = blocks[0]
            for blk in blocks[1:]:
                m = jnp.maximum(m, blk)
            pooled1.append(m)

    # ---------------- layer2: conv2 (3x3, 64 -> 1, pad=1) on the 3x3 pooled map ----------
    # folded into per-site (64, 9) weight slabs: c2[n, h*3+w] = sum_q pooled1_q[n,:] @ T2[q]
    c2 = jnp.zeros((n_batch, 9), jnp.float32)
    for q in range(9):
        c2 = c2 + jnp.dot(pooled1[q], t2_ref[q], preferred_element_type=jnp.float32)
    c2 = c2 + b2_ref[...]                                       # (N, 9)

    # training-mode BatchNorm2d(1): stats over all N*3*3 values
    cnt2 = float(n_batch * 9)
    s2 = jnp.sum(jnp.sum(c2, axis=1, keepdims=True), axis=0, keepdims=True)
    mean2 = s2 / cnt2                                           # (1, 1)
    d2 = c2 - mean2
    v2 = jnp.sum(jnp.sum(d2 * d2, axis=1, keepdims=True), axis=0, keepdims=True) / cnt2
    scale2 = g2_ref[...] * jax.lax.rsqrt(v2 + BN_EPS)
    shift2 = be2_ref[...] - mean2 * scale2
    r2 = jnp.maximum(c2 * scale2 + shift2, 0.0)                 # ReLU, (N, 9)

    # ---------------- MaxPool2d(kernel=2, padding=1): 3x3 -> 2x2, then flatten ----------
    def lane(c):
        return r2[:, c:c + 1]                                   # (N, 1)

    f00 = lane(0)
    f01 = jnp.maximum(lane(1), lane(2))
    f10 = jnp.maximum(lane(3), lane(6))
    f11 = jnp.maximum(jnp.maximum(lane(4), lane(5)), jnp.maximum(lane(7), lane(8)))

    # ---------------- fc3 (4 -> 8) + ReLU, fc4 (8 -> 1) ----------------
    w3 = w3_ref[...]                                            # (4, 8)  (torch weight.T)
    h3 = (f00 * w3[0:1, :] + f01 * w3[1:2, :] +
          f10 * w3[2:3, :] + f11 * w3[3:4, :] + b3_ref[...])    # (N, 8)
    h3 = jnp.maximum(h3, 0.0)
    out = jnp.sum(h3 * w4_ref[...], axis=1, keepdims=True) + b4_ref[...]   # (N, 1)
    out_ref[...] = out


def _build_conv2_slabs(w2):
    # w2: torch layout (1, 64, 3, 3).  T2[u*3+v, c, h*3+w] = w2[0, c, u-h+1, v-w+1] (valid taps)
    t2 = jnp.zeros((9, 64, 9), jnp.float32)
    for u in range(3):
        for v in range(3):
            for h in range(3):
                for w in range(3):
                    dy, dx = u - h + 1, v - w + 1
                    if 0 <= dy < 3 and 0 <= dx < 3:
                        t2 = t2.at[u * 3 + v, :, h * 3 + w].set(w2[0, :, dy, dx])
    return t2


def relation_network_forward(params, x, rn=None):
    # `rn` is an argument of the reference forward but is never used there; ignored here too.
    x = x.reshape(-1, 64, 5, 5).astype(jnp.float32)             # mirrors x.view(-1, 64, 5, 5)
    n = x.shape[0]

    # ---- wrapper-side layout glue: channels-last im2col, taps packed into K = 9*64 = 576 ----
    x_nhwc = jnp.transpose(x, (0, 2, 3, 1))                     # (N, 5, 5, 64)
    xpad = jnp.pad(x_nhwc, ((0, 0), (1, 1), (1, 1), (0, 0)))    # (N, 7, 7, 64)
    taps = jnp.stack([xpad[:, dy:dy + 5, dx:dx + 5, :]
                      for dy in range(3) for dx in range(3)], axis=3)      # (N, 5, 5, 9, 64)
    p1 = jnp.transpose(taps, (1, 2, 0, 3, 4)).reshape(25 * n, 9 * 64)      # rows: (h*5+w)*N + n

    w1r = jnp.transpose(params["w1"], (2, 3, 1, 0)).reshape(9 * 64, 64)    # (576, 64)
    t2 = _build_conv2_slabs(params["w2"])                                  # (9, 64, 9)

    ins = (
        p1, w1r,
        params["b1"].reshape(1, 64), params["g1"].reshape(1, 64), params["be1"].reshape(1, 64),
        t2,
        params["b2"].reshape(1, 1), params["g2"].reshape(1, 1), params["be2"].reshape(1, 1),
        jnp.transpose(params["w3"]),                    # (4, 8)
        params["b3"].reshape(1, 8),
        params["w4"].reshape(1, 8),
        params["b4"].reshape(1, 1),
    )

    def full_spec(a):
        nd = a.ndim
        return pl.BlockSpec(a.shape, lambda i, _nd=nd: (0,) * _nd)

    out = pl.pallas_call(
        functools.partial(relation_forward_kernel, n_batch=n),
        out_shape=jax.ShapeDtypeStruct((n, 1), jnp.float32),
        grid=(1,),
        in_specs=[full_spec(a) for a in ins],
        out_specs=pl.BlockSpec((n, 1), lambda i: (0, 0)),
        compiler_params=pltpu.CompilerParams(
            dimension_semantics=("arbitrary",),
            vmem_limit_bytes=32 * 1024 * 1024),
    )(*ins)
    return out
    # TODO(synk): BatchNorm running-statistics buffer updates (training side effect) and
    # eval-mode running-stat normalization are not modeled; this is the training-mode forward.


def init_params(key):
    k = jax.random.split(key, 8)
    w1 = jax.random.normal(k[0], (64, 64, 3, 3), jnp.float32) * (2.0 / (64 * 9)) ** 0.5
    b1 = jax.random.normal(k[1], (64,), jnp.float32) * 0.01
    w2 = jax.random.normal(k[2], (1, 64, 3, 3), jnp.float32) * (2.0 / (64 * 9)) ** 0.5
    b2 = jax.random.normal(k[3], (1,), jnp.float32) * 0.01
    w3 = jax.random.normal(k[4], (8, 4), jnp.float32) * (1.0 / 4.0) ** 0.5
    b3 = jax.random.normal(k[5], (8,), jnp.float32) * 0.01
    w4 = jax.random.normal(k[6], (1, 8), jnp.float32) * (1.0 / 8.0) ** 0.5
    b4 = jax.random.normal(k[7], (1,), jnp.float32) * 0.01
    return dict(w1=w1, b1=b1, g1=jnp.ones((64,), jnp.float32), be1=jnp.zeros((64,), jnp.float32),
                w2=w2, b2=b2, g2=jnp.ones((1,), jnp.float32), be2=jnp.zeros((1,), jnp.float32),
                w3=w3, b3=b3, w4=w4, b4=b4)


if __name__ == "__main__":
    key = jax.random.PRNGKey(0)
    kp, kx = jax.random.split(key)
    params = init_params(kp)

    # small episode: 4 relation pairs, each a (64, 5, 5) feature map (module hard-codes 64x5x5)
    n = 4
    x = jax.random.normal(kx, (n, 64, 5, 5), jnp.float32)

    fwd = jax.jit(relation_network_forward)
    out = fwd(params, x)
    jax.block_until_ready(out)
    assert out.shape == (n, 1)
    print("KERNEL_OK")
</pallas_src>

<mosaic_0001>
module attributes {stable_mosaic.version = 11 : i64} {
  func.func @relation_forward_kernel(%arg0: i32, %arg1: memref<100x576xf32, #tpu.memory_space<vmem>>, %arg2: memref<576x64xf32, #tpu.memory_space<vmem>>, %arg3: memref<1x64xf32, #tpu.memory_space<vmem>>, %arg4: memref<1x64xf32, #tpu.memory_space<vmem>>, %arg5: memref<1x64xf32, #tpu.memory_space<vmem>>, %arg6: memref<9x64x9xf32, #tpu.memory_space<vmem>>, %arg7: memref<1x1xf32, #tpu.memory_space<vmem>>, %arg8: memref<1x1xf32, #tpu.memory_space<vmem>>, %arg9: memref<1x1xf32, #tpu.memory_space<vmem>>, %arg10: memref<4x8xf32, #tpu.memory_space<vmem>>, %arg11: memref<1x8xf32, #tpu.memory_space<vmem>>, %arg12: memref<1x8xf32, #tpu.memory_space<vmem>>, %arg13: memref<1x1xf32, #tpu.memory_space<vmem>>, %arg14: memref<4x1xf32, #tpu.memory_space<vmem>>) attributes {dimension_semantics = [#tpu.dimension_semantics<arbitrary>], iteration_bounds = array<i64: 1>, scalar_prefetch = 0 : i64, scratch_operands = 0 : i64, tpu.core_type = #tpu.core_type<tc>, window_params = [{pipeline_mode = #tpu.pipeline_mode<synchronous>, transform_indices = @transform_0, window_bounds = array<i64: 100, 576>}, {pipeline_mode = #tpu.pipeline_mode<synchronous>, transform_indices = @transform_1, window_bounds = array<i64: 576, 64>}, {pipeline_mode = #tpu.pipeline_mode<synchronous>, transform_indices = @transform_2, window_bounds = array<i64: 1, 64>}, {pipeline_mode = #tpu.pipeline_mode<synchronous>, transform_indices = @transform_3, window_bounds = array<i64: 1, 64>}, {pipeline_mode = #tpu.pipeline_mode<synchronous>, transform_indices = @transform_4, window_bounds = array<i64: 1, 64>}, {pipeline_mode = #tpu.pipeline_mode<synchronous>, transform_indices = @transform_5, window_bounds = array<i64: 9, 64, 9>}, {pipeline_mode = #tpu.pipeline_mode<synchronous>, transform_indices = @transform_6, window_bounds = array<i64: 1, 1>}, {pipeline_mode = #tpu.pipeline_mode<synchronous>, transform_indices = @transform_7, window_bounds = array<i64: 1, 1>}, {pipeline_mode = #tpu.pipeline_mode<synchronous>, transform_indices = @transform_8, window_bounds = array<i64: 1, 1>}, {pipeline_mode = #tpu.pipeline_mode<synchronous>, transform_indices = @transform_9, window_bounds = array<i64: 4, 8>}, {pipeline_mode = #tpu.pipeline_mode<synchronous>, transform_indices = @transform_10, window_bounds = array<i64: 1, 8>}, {pipeline_mode = #tpu.pipeline_mode<synchronous>, transform_indices = @transform_11, window_bounds = array<i64: 1, 8>}, {pipeline_mode = #tpu.pipeline_mode<synchronous>, transform_indices = @transform_12, window_bounds = array<i64: 1, 1>}, {pipeline_mode = #tpu.pipeline_mode<synchronous>, transform_indices = @transform_13, window_bounds = array<i64: 4, 1>}]} {
    %c0 = arith.constant 0 : index
    %c0_0 = arith.constant 0 : index
    %0 = vector.load %arg1[%c0, %c0_0] : memref<100x576xf32, #tpu.memory_space<vmem>>, vector<100x576xf32>
    %c0_1 = arith.constant 0 : index
    %c0_2 = arith.constant 0 : index
    %1 = vector.load %arg2[%c0_1, %c0_2] : memref<576x64xf32, #tpu.memory_space<vmem>>, vector<576x64xf32>
    %cst = arith.constant dense<0.000000e+00> : vector<100x64xf32>
    %2 = tpu.matmul %0, %1, %cst {dimension_numbers = #tpu.dot_dimension_numbers<[1], [0], [0], [1], [0, 0, 1, 1], [], []>} : vector<100x576xf32>, vector<576x64xf32>, vector<100x64xf32> -> vector<100x64xf32>
    %c0_3 = arith.constant 0 : index
    %c0_4 = arith.constant 0 : index
    %3 = vector.load %arg3[%c0_3, %c0_4] : memref<1x64xf32, #tpu.memory_space<vmem>>, vector<1x64xf32>
    %4 = vector.broadcast %3 : vector<1x64xf32> to vector<100x64xf32>
    %5 = arith.addf %2, %4 : vector<100x64xf32>
    %cst_5 = arith.constant dense<0.000000e+00> : vector<64xf32>
    %6 = vector.multi_reduction <add>, %5, %cst_5 [0] : vector<100x64xf32> to vector<64xf32>
    %7 = vector.shape_cast %6 : vector<64xf32> to vector<1x64xf32>
    %cst_6 = arith.constant 1.000000e+02 : f32
    %8 = vector.broadcast %cst_6 : f32 to vector<1x64xf32>
    %9 = arith.divf %7, %8 : vector<1x64xf32>
    %10 = vector.broadcast %9 : vector<1x64xf32> to vector<100x64xf32>
    %11 = arith.subf %5, %10 : vector<100x64xf32>
    %12 = arith.mulf %11, %11 : vector<100x64xf32>
    %cst_7 = arith.constant dense<0.000000e+00> : vector<64xf32>
    %13 = vector.multi_reduction <add>, %12, %cst_7 [0] : vector<100x64xf32> to vector<64xf32>
    %14 = vector.shape_cast %13 : vector<64xf32> to vector<1x64xf32>
    %cst_8 = arith.constant 1.000000e+02 : f32
    %15 = vector.broadcast %cst_8 : f32 to vector<1x64xf32>
    %16 = arith.divf %14, %15 : vector<1x64xf32>
    %c0_9 = arith.constant 0 : index
    %c0_10 = arith.constant 0 : index
    %17 = vector.load %arg4[%c0_9, %c0_10] : memref<1x64xf32, #tpu.memory_space<vmem>>, vector<1x64xf32>
    %cst_11 = arith.constant 9.99999974E-6 : f32
    %18 = vector.broadcast %cst_11 : f32 to vector<1x64xf32>
    %19 = arith.addf %16, %18 : vector<1x64xf32>
    %20 = math.rsqrt %19 : vector<1x64xf32>
    %21 = arith.mulf %17, %20 : vector<1x64xf32>
    %c0_12 = arith.constant 0 : index
    %c0_13 = arith.constant 0 : index
    %22 = vector.load %arg5[%c0_12, %c0_13] : memref<1x64xf32, #tpu.memory_space<vmem>>, vector<1x64xf32>
    %23 = arith.mulf %9, %21 : vector<1x64xf32>
    %24 = arith.subf %22, %23 : vector<1x64xf32>
    %25 = vector.broadcast %21 : vector<1x64xf32> to vector<100x64xf32>
    %26 = arith.mulf %5, %25 : vector<100x64xf32>
    %27 = vector.broadcast %24 : vector<1x64xf32> to vector<100x64xf32>
    %28 = arith.addf %26, %27 : vector<100x64xf32>
    %cst_14 = arith.constant 0.000000e+00 : f32
    %29 = vector.broadcast %cst_14 : f32 to vector<100x64xf32>
    %30 = arith.maximumf %28, %29 : vector<100x64xf32>
    %31 = vector.extract_strided_slice %30 {offsets = [0, 0], sizes = [4, 64], strides = [1, 1]} : vector<100x64xf32> to vector<4x64xf32>
    %32 = vector.extract_strided_slice %30 {offsets = [4, 0], sizes = [4, 64], strides = [1, 1]} : vector<100x64xf32> to vector<4x64xf32>
    %33 = vector.extract_strided_slice %30 {offsets = [8, 0], sizes = [4, 64], strides = [1, 1]} : vector<100x64xf32> to vector<4x64xf32>
    %34 = arith.maximumf %32, %33 : vector<4x64xf32>
    %35 = vector.extract_strided_slice %30 {offsets = [12, 0], sizes = [4, 64], strides = [1, 1]} : vector<100x64xf32> to vector<4x64xf32>
    %36 = vector.extract_strided_slice %30 {offsets = [16, 0], sizes = [4, 64], strides = [1, 1]} : vector<100x64xf32> to vector<4x64xf32>
    %37 = arith.maximumf %35, %36 : vector<4x64xf32>
    %38 = vector.extract_strided_slice %30 {offsets = [20, 0], sizes = [4, 64], strides = [1, 1]} : vector<100x64xf32> to vector<4x64xf32>
    %39 = vector.extract_strided_slice %30 {offsets = [40, 0], sizes = [4, 64], strides = [1, 1]} : vector<100x64xf32> to vector<4x64xf32>
    %40 = arith.maximumf %38, %39 : vector<4x64xf32>
    %41 = vector.extract_strided_slice %30 {offsets = [24, 0], sizes = [4, 64], strides = [1, 1]} : vector<100x64xf32> to vector<4x64xf32>
    %42 = vector.extract_strided_slice %30 {offsets = [28, 0], sizes = [4, 64], strides = [1, 1]} : vector<100x64xf32> to vector<4x64xf32>
    %43 = vector.extract_strided_slice %30 {offsets = [44, 0], sizes = [4, 64], strides = [1, 1]} : vector<100x64xf32> to vector<4x64xf32>
    %44 = vector.extract_strided_slice %30 {offsets = [48, 0], sizes = [4, 64], strides = [1, 1]} : vector<100x64xf32> to vector<4x64xf32>
    %45 = arith.maximumf %41, %42 : vector<4x64xf32>
    %46 = arith.maximumf %45, %43 : vector<4x64xf32>
    %47 = arith.maximumf %46, %44 : vector<4x64xf32>
    %48 = vector.extract_strided_slice %30 {offsets = [32, 0], sizes = [4, 64], strides = [1, 1]} : vector<100x64xf32> to vector<4x64xf32>
    %49 = vector.extract_strided_slice %30 {offsets = [36, 0], sizes = [4, 64], strides = [1, 1]} : vector<100x64xf32> to vector<4x64xf32>
    %50 = vector.extract_strided_slice %30 {offsets = [52, 0], sizes = [4, 64], strides = [1, 1]} : vector<100x64xf32> to vector<4x64xf32>
    %51 = vector.extract_strided_slice %30 {offsets = [56, 0], sizes = [4, 64], strides = [1, 1]} : vector<100x64xf32> to vector<4x64xf32>
    %52 = arith.maximumf %48, %49 : vector<4x64xf32>
    %53 = arith.maximumf %52, %50 : vector<4x64xf32>
    %54 = arith.maximumf %53, %51 : vector<4x64xf32>
    %55 = vector.extract_strided_slice %30 {offsets = [60, 0], sizes = [4, 64], strides = [1, 1]} : vector<100x64xf32> to vector<4x64xf32>
    %56 = vector.extract_strided_slice %30 {offsets = [80, 0], sizes = [4, 64], strides = [1, 1]} : vector<100x64xf32> to vector<4x64xf32>
    %57 = arith.maximumf %55, %56 : vector<4x64xf32>
    %58 = vector.extract_strided_slice %30 {offsets = [64, 0], sizes = [4, 64], strides = [1, 1]} : vector<100x64xf32> to vector<4x64xf32>
    %59 = vector.extract_strided_slice %30 {offsets = [68, 0], sizes = [4, 64], strides = [1, 1]} : vector<100x64xf32> to vector<4x64xf32>
    %60 = vector.extract_strided_slice %30 {offsets = [84, 0], sizes = [4, 64], strides = [1, 1]} : vector<100x64xf32> to vector<4x64xf32>
    %61 = vector.extract_strided_slice %30 {offsets = [88, 0], sizes = [4, 64], strides = [1, 1]} : vector<100x64xf32> to vector<4x64xf32>
    %62 = arith.maximumf %58, %59 : vector<4x64xf32>
    %63 = arith.maximumf %62, %60 : vector<4x64xf32>
    %64 = arith.maximumf %63, %61 : vector<4x64xf32>
    %65 = vector.extract_strided_slice %30 {offsets = [72, 0], sizes = [4, 64], strides = [1, 1]} : vector<100x64xf32> to vector<4x64xf32>
    %66 = vector.extract_strided_slice %30 {offsets = [76, 0], sizes = [4, 64], strides = [1, 1]} : vector<100x64xf32> to vector<4x64xf32>
    %67 = vector.extract_strided_slice %30 {offsets = [92, 0], sizes = [4, 64], strides = [1, 1]} : vector<100x64xf32> to vector<4x64xf32>
    %68 = vector.extract_strided_slice %30 {offsets = [96, 0], sizes = [4, 64], strides = [1, 1]} : vector<100x64xf32> to vector<4x64xf32>
    %69 = arith.maximumf %65, %66 : vector<4x64xf32>
    %70 = arith.maximumf %69, %67 : vector<4x64xf32>
    %71 = arith.maximumf %70, %68 : vector<4x64xf32>
    %cst_15 = arith.constant 0.000000e+00 : f32
    %72 = vector.broadcast %cst_15 : f32 to vector<4x9xf32>
    %c0_16 = arith.constant 0 : index
    %c0_17 = arith.constant 0 : index
    %c0_18 = arith.constant 0 : index
    %73 = vector.load %arg6[%c0_16, %c0_17, %c0_18] : memref<9x64x9xf32, #tpu.memory_space<vmem>>, vector<1x64x9xf32>
    %74 = vector.shape_cast %73 : vector<1x64x9xf32> to vector<64x9xf32>
    %cst_19 = arith.constant dense<0.000000e+00> : vector<4x9xf32>
    %75 = tpu.matmul %31, %74, %cst_19 {dimension_numbers = #tpu.dot_dimension_numbers<[1], [0], [0], [1], [0, 0, 1, 1], [], []>} : vector<4x64xf32>, vector<64x9xf32>, vector<4x9xf32> -> vector<4x9xf32>
    %76 = arith.addf %72, %75 : vector<4x9xf32>
    %c1 = arith.constant 1 : index
    %c0_20 = arith.constant 0 : index
    %c0_21 = arith.constant 0 : index
    %77 = vector.load %arg6[%c1, %c0_20, %c0_21] : memref<9x64x9xf32, #tpu.memory_space<vmem>>, vector<1x64x9xf32>
    %78 = vector.shape_cast %77 : vector<1x64x9xf32> to vector<64x9xf32>
    %cst_22 = arith.constant dense<0.000000e+00> : vector<4x9xf32>
    %79 = tpu.matmul %34, %78, %cst_22 {dimension_numbers = #tpu.dot_dimension_numbers<[1], [0], [0], [1], [0, 0, 1, 1], [], []>} : vector<4x64xf32>, vector<64x9xf32>, vector<4x9xf32> -> vector<4x9xf32>
    %80 = arith.addf %76, %79 : vector<4x9xf32>
    %c2 = arith.constant 2 : index
    %c0_23 = arith.constant 0 : index
    %c0_24 = arith.constant 0 : index
    %81 = vector.load %arg6[%c2, %c0_23, %c0_24] : memref<9x64x9xf32, #tpu.memory_space<vmem>>, vector<1x64x9xf32>
    %82 = vector.shape_cast %81 : vector<1x64x9xf32> to vector<64x9xf32>
    %cst_25 = arith.constant dense<0.000000e+00> : vector<4x9xf32>
    %83 = tpu.matmul %37, %82, %cst_25 {dimension_numbers = #tpu.dot_dimension_numbers<[1], [0], [0], [1], [0, 0, 1, 1], [], []>} : vector<4x64xf32>, vector<64x9xf32>, vector<4x9xf32> -> vector<4x9xf32>
    %84 = arith.addf %80, %83 : vector<4x9xf32>
    %c3 = arith.constant 3 : index
    %c0_26 = arith.constant 0 : index
    %c0_27 = arith.constant 0 : index
    %85 = vector.load %arg6[%c3, %c0_26, %c0_27] : memref<9x64x9xf32, #tpu.memory_space<vmem>>, vector<1x64x9xf32>
    %86 = vector.shape_cast %85 : vector<1x64x9xf32> to vector<64x9xf32>
    %cst_28 = arith.constant dense<0.000000e+00> : vector<4x9xf32>
    %87 = tpu.matmul %40, %86, %cst_28 {dimension_numbers = #tpu.dot_dimension_numbers<[1], [0], [0], [1], [0, 0, 1, 1], [], []>} : vector<4x64xf32>, vector<64x9xf32>, vector<4x9xf32> -> vector<4x9xf32>
    %88 = arith.addf %84, %87 : vector<4x9xf32>
    %c4 = arith.constant 4 : index
    %c0_29 = arith.constant 0 : index
    %c0_30 = arith.constant 0 : index
    %89 = vector.load %arg6[%c4, %c0_29, %c0_30] : memref<9x64x9xf32, #tpu.memory_space<vmem>>, vector<1x64x9xf32>
    %90 = vector.shape_cast %89 : vector<1x64x9xf32> to vector<64x9xf32>
    %cst_31 = arith.constant dense<0.000000e+00> : vector<4x9xf32>
    %91 = tpu.matmul %47, %90, %cst_31 {dimension_numbers = #tpu.dot_dimension_numbers<[1], [0], [0], [1], [0, 0, 1, 1], [], []>} : vector<4x64xf32>, vector<64x9xf32>, vector<4x9xf32> -> vector<4x9xf32>
    %92 = arith.addf %88, %91 : vector<4x9xf32>
    %c5 = arith.constant 5 : index
    %c0_32 = arith.constant 0 : index
    %c0_33 = arith.constant 0 : index
    %93 = vector.load %arg6[%c5, %c0_32, %c0_33] : memref<9x64x9xf32, #tpu.memory_space<vmem>>, vector<1x64x9xf32>
    %94 = vector.shape_cast %93 : vector<1x64x9xf32> to vector<64x9xf32>
    %cst_34 = arith.constant dense<0.000000e+00> : vector<4x9xf32>
    %95 = tpu.matmul %54, %94, %cst_34 {dimension_numbers = #tpu.dot_dimension_numbers<[1], [0], [0], [1], [0, 0, 1, 1], [], []>} : vector<4x64xf32>, vector<64x9xf32>, vector<4x9xf32> -> vector<4x9xf32>
    %96 = arith.addf %92, %95 : vector<4x9xf32>
    %c6 = arith.constant 6 : index
    %c0_35 = arith.constant 0 : index
    %c0_36 = arith.constant 0 : index
    %97 = vector.load %arg6[%c6, %c0_35, %c0_36] : memref<9x64x9xf32, #tpu.memory_space<vmem>>, vector<1x64x9xf32>
    %98 = vector.shape_cast %97 : vector<1x64x9xf32> to vector<64x9xf32>
    %cst_37 = arith.constant dense<0.000000e+00> : vector<4x9xf32>
    %99 = tpu.matmul %57, %98, %cst_37 {dimension_numbers = #tpu.dot_dimension_numbers<[1], [0], [0], [1], [0, 0, 1, 1], [], []>} : vector<4x64xf32>, vector<64x9xf32>, vector<4x9xf32> -> vector<4x9xf32>
    %100 = arith.addf %96, %99 : vector<4x9xf32>
    %c7 = arith.constant 7 : index
    %c0_38 = arith.constant 0 : index
    %c0_39 = arith.constant 0 : index
    %101 = vector.load %arg6[%c7, %c0_38, %c0_39] : memref<9x64x9xf32, #tpu.memory_space<vmem>>, vector<1x64x9xf32>
    %102 = vector.shape_cast %101 : vector<1x64x9xf32> to vector<64x9xf32>
    %cst_40 = arith.constant dense<0.000000e+00> : vector<4x9xf32>
    %103 = tpu.matmul %64, %102, %cst_40 {dimension_numbers = #tpu.dot_dimension_numbers<[1], [0], [0], [1], [0, 0, 1, 1], [], []>} : vector<4x64xf32>, vector<64x9xf32>, vector<4x9xf32> -> vector<4x9xf32>
    %104 = arith.addf %100, %103 : vector<4x9xf32>
    %c8 = arith.constant 8 : index
    %c0_41 = arith.constant 0 : index
    %c0_42 = arith.constant 0 : index
    %105 = vector.load %arg6[%c8, %c0_41, %c0_42] : memref<9x64x9xf32, #tpu.memory_space<vmem>>, vector<1x64x9xf32>
    %106 = vector.shape_cast %105 : vector<1x64x9xf32> to vector<64x9xf32>
    %cst_43 = arith.constant dense<0.000000e+00> : vector<4x9xf32>
    %107 = tpu.matmul %71, %106, %cst_43 {dimension_numbers = #tpu.dot_dimension_numbers<[1], [0], [0], [1], [0, 0, 1, 1], [], []>} : vector<4x64xf32>, vector<64x9xf32>, vector<4x9xf32> -> vector<4x9xf32>
    %108 = arith.addf %104, %107 : vector<4x9xf32>
    %c0_44 = arith.constant 0 : index
    %c0_45 = arith.constant 0 : index
    %109 = vector.load %arg7[%c0_44, %c0_45] : memref<1x1xf32, #tpu.memory_space<vmem>>, vector<1x1xf32>
    %110 = vector.broadcast %109 : vector<1x1xf32> to vector<4x9xf32>
    %111 = arith.addf %108, %110 : vector<4x9xf32>
    %cst_46 = arith.constant dense<0.000000e+00> : vector<4xf32>
    %112 = vector.multi_reduction <add>, %111, %cst_46 [1] : vector<4x9xf32> to vector<4xf32>
    %113 = vector.shape_cast %112 : vector<4xf32> to vector<4x1xf32>
    %cst_47 = arith.constant dense<0.000000e+00> : vector<1xf32>
    %114 = vector.multi_reduction <add>, %113, %cst_47 [0] : vector<4x1xf32> to vector<1xf32>
    %115 = vector.shape_cast %114 : vector<1xf32> to vector<1x1xf32>
    %cst_48 = arith.constant 3.600000e+01 : f32
    %116 = vector.broadcast %cst_48 : f32 to vector<1x1xf32>
    %117 = arith.divf %115, %116 : vector<1x1xf32>
    %118 = vector.broadcast %117 : vector<1x1xf32> to vector<4x9xf32>
    %119 = arith.subf %111, %118 : vector<4x9xf32>
    %120 = arith.mulf %119, %119 : vector<4x9xf32>
    %cst_49 = arith.constant dense<0.000000e+00> : vector<4xf32>
    %121 = vector.multi_reduction <add>, %120, %cst_49 [1] : vector<4x9xf32> to vector<4xf32>
    %122 = vector.shape_cast %121 : vector<4xf32> to vector<4x1xf32>
    %cst_50 = arith.constant dense<0.000000e+00> : vector<1xf32>
    %123 = vector.multi_reduction <add>, %122, %cst_50 [0] : vector<4x1xf32> to vector<1xf32>
    %124 = vector.shape_cast %123 : vector<1xf32> to vector<1x1xf32>
    %cst_51 = arith.constant 3.600000e+01 : f32
    %125 = vector.broadcast %cst_51 : f32 to vector<1x1xf32>
    %126 = arith.divf %124, %125 : vector<1x1xf32>
    %c0_52 = arith.constant 0 : index
    %c0_53 = arith.constant 0 : index
    %127 = vector.load %arg8[%c0_52, %c0_53] : memref<1x1xf32, #tpu.memory_space<vmem>>, vector<1x1xf32>
    %cst_54 = arith.constant 9.99999974E-6 : f32
    %128 = vector.broadcast %cst_54 : f32 to vector<1x1xf32>
    %129 = arith.addf %126, %128 : vector<1x1xf32>
    %130 = math.rsqrt %129 : vector<1x1xf32>
    %131 = arith.mulf %127, %130 : vector<1x1xf32>
    %c0_55 = arith.constant 0 : index
    %c0_56 = arith.constant 0 : index
    %132 = vector.load %arg9[%c0_55, %c0_56] : memref<1x1xf32, #tpu.memory_space<vmem>>, vector<1x1xf32>
    %133 = arith.mulf %117, %131 : vector<1x1xf32>
    %134 = arith.subf %132, %133 : vector<1x1xf32>
    %135 = vector.broadcast %131 : vector<1x1xf32> to vector<4x9xf32>
    %136 = arith.mulf %111, %135 : vector<4x9xf32>
    %137 = vector.broadcast %134 : vector<1x1xf32> to vector<4x9xf32>
    %138 = arith.addf %136, %137 : vector<4x9xf32>
    %cst_57 = arith.constant 0.000000e+00 : f32
    %139 = vector.broadcast %cst_57 : f32 to vector<4x9xf32>
    %140 = arith.maximumf %138, %139 : vector<4x9xf32>
    %141 = vector.extract_strided_slice %140 {offsets = [0, 0], sizes = [4, 1], strides = [1, 1]} : vector<4x9xf32> to vector<4x1xf32>
    %142 = vector.extract_strided_slice %140 {offsets = [0, 1], sizes = [4, 1], strides = [1, 1]} : vector<4x9xf32> to vector<4x1xf32>
    %143 = vector.extract_strided_slice %140 {offsets = [0, 2], sizes = [4, 1], strides = [1, 1]} : vector<4x9xf32> to vector<4x1xf32>
    %144 = arith.maximumf %142, %143 : vector<4x1xf32>
    %145 = vector.extract_strided_slice %140 {offsets = [0, 3], sizes = [4, 1], strides = [1, 1]} : vector<4x9xf32> to vector<4x1xf32>
    %146 = vector.extract_strided_slice %140 {offsets = [0, 6], sizes = [4, 1], strides = [1, 1]} : vector<4x9xf32> to vector<4x1xf32>
    %147 = arith.maximumf %145, %146 : vector<4x1xf32>
    %148 = vector.extract_strided_slice %140 {offsets = [0, 4], sizes = [4, 1], strides = [1, 1]} : vector<4x9xf32> to vector<4x1xf32>
    %149 = vector.extract_strided_slice %140 {offsets = [0, 5], sizes = [4, 1], strides = [1, 1]} : vector<4x9xf32> to vector<4x1xf32>
    %150 = arith.maximumf %148, %149 : vector<4x1xf32>
    %151 = vector.extract_strided_slice %140 {offsets = [0, 7], sizes = [4, 1], strides = [1, 1]} : vector<4x9xf32> to vector<4x1xf32>
    %152 = vector.extract_strided_slice %140 {offsets = [0, 8], sizes = [4, 1], strides = [1, 1]} : vector<4x9xf32> to vector<4x1xf32>
    %153 = arith.maximumf %151, %152 : vector<4x1xf32>
    %154 = arith.maximumf %150, %153 : vector<4x1xf32>
    %c0_58 = arith.constant 0 : index
    %c0_59 = arith.constant 0 : index
    %155 = vector.load %arg10[%c0_58, %c0_59] : memref<4x8xf32, #tpu.memory_space<vmem>>, vector<4x8xf32>
    %156 = vector.extract_strided_slice %155 {offsets = [0, 0], sizes = [1, 8], strides = [1, 1]} : vector<4x8xf32> to vector<1x8xf32>
    %157 = vector.broadcast %141 : vector<4x1xf32> to vector<4x8xf32>
    %158 = vector.broadcast %156 : vector<1x8xf32> to vector<4x8xf32>
    %159 = arith.mulf %157, %158 : vector<4x8xf32>
    %160 = vector.extract_strided_slice %155 {offsets = [1, 0], sizes = [1, 8], strides = [1, 1]} : vector<4x8xf32> to vector<1x8xf32>
    %161 = vector.broadcast %144 : vector<4x1xf32> to vector<4x8xf32>
    %162 = vector.broadcast %160 : vector<1x8xf32> to vector<4x8xf32>
    %163 = arith.mulf %161, %162 : vector<4x8xf32>
    %164 = arith.addf %159, %163 : vector<4x8xf32>
    %165 = vector.extract_strided_slice %155 {offsets = [2, 0], sizes = [1, 8], strides = [1, 1]} : vector<4x8xf32> to vector<1x8xf32>
    %166 = vector.broadcast %147 : vector<4x1xf32> to vector<4x8xf32>
    %167 = vector.broadcast %165 : vector<1x8xf32> to vector<4x8xf32>
    %168 = arith.mulf %166, %167 : vector<4x8xf32>
    %169 = arith.addf %164, %168 : vector<4x8xf32>
    %170 = vector.extract_strided_slice %155 {offsets = [3, 0], sizes = [1, 8], strides = [1, 1]} : vector<4x8xf32> to vector<1x8xf32>
    %171 = vector.broadcast %154 : vector<4x1xf32> to vector<4x8xf32>
    %172 = vector.broadcast %170 : vector<1x8xf32> to vector<4x8xf32>
    %173 = arith.mulf %171, %172 : vector<4x8xf32>
    %174 = arith.addf %169, %173 : vector<4x8xf32>
    %c0_60 = arith.constant 0 : index
    %c0_61 = arith.constant 0 : index
    %175 = vector.load %arg11[%c0_60, %c0_61] : memref<1x8xf32, #tpu.memory_space<vmem>>, vector<1x8xf32>
    %176 = vector.broadcast %175 : vector<1x8xf32> to vector<4x8xf32>
    %177 = arith.addf %174, %176 : vector<4x8xf32>
    %cst_62 = arith.constant 0.000000e+00 : f32
    %178 = vector.broadcast %cst_62 : f32 to vector<4x8xf32>
    %179 = arith.maximumf %177, %178 : vector<4x8xf32>
    %c0_63 = arith.constant 0 : index
    %c0_64 = arith.constant 0 : index
    %180 = vector.load %arg12[%c0_63, %c0_64] : memref<1x8xf32, #tpu.memory_space<vmem>>, vector<1x8xf32>
    %181 = vector.broadcast %180 : vector<1x8xf32> to vector<4x8xf32>
    %182 = arith.mulf %179, %181 : vector<4x8xf32>
    %cst_65 = arith.constant dense<0.000000e+00> : vector<4xf32>
    %183 = vector.multi_reduction <add>, %182, %cst_65 [1] : vector<4x8xf32> to vector<4xf32>
    %184 = vector.shape_cast %183 : vector<4xf32> to vector<4x1xf32>
    %c0_66 = arith.constant 0 : index
    %c0_67 = arith.constant 0 : index
    %185 = vector.load %arg13[%c0_66, %c0_67] : memref<1x1xf32, #tpu.memory_space<vmem>>, vector<1x1xf32>
    %186 = vector.broadcast %185 : vector<1x1xf32> to vector<4x1xf32>
    %187 = arith.addf %184, %186 : vector<4x1xf32>
    %c0_68 = arith.constant 0 : index
    %c0_69 = arith.constant 0 : index
    %188 = vector.load %arg14[%c0_68, %c0_69] : memref<4x1xf32, #tpu.memory_space<vmem>>, vector<4x1xf32>
    tpu.vector_store %arg14[%c0_68, %c0_69], %187 {strides = array<i32>} : memref<4x1xf32, #tpu.memory_space<vmem>>, vector<4x1xf32>,
    return
  }
  func.func @transform_0(%arg0: i32) -> (i32, i32) {
    %c0_i32 = arith.constant 0 : i32
    %c0_i32_0 = arith.constant 0 : i32
    %c0_i32_1 = arith.constant 0 : i32
    return %c0_i32, %c0_i32_0 : i32, i32
  }
  func.func @transform_1(%arg0: i32) -> (i32, i32) {
    %c0_i32 = arith.constant 0 : i32
    %c0_i32_0 = arith.constant 0 : i32
    %c0_i32_1 = arith.constant 0 : i32
    return %c0_i32, %c0_i32_0 : i32, i32
  }
  func.func @transform_2(%arg0: i32) -> (i32, i32) {
    %c0_i32 = arith.constant 0 : i32
    %c0_i32_0 = arith.constant 0 : i32
    %c0_i32_1 = arith.constant 0 : i32
    return %c0_i32, %c0_i32_0 : i32, i32
  }
  func.func @transform_3(%arg0: i32) -> (i32, i32) {
    %c0_i32 = arith.constant 0 : i32
    %c0_i32_0 = arith.constant 0 : i32
    %c0_i32_1 = arith.constant 0 : i32
    return %c0_i32, %c0_i32_0 : i32, i32
  }
  func.func @transform_4(%arg0: i32) -> (i32, i32) {
    %c0_i32 = arith.constant 0 : i32
    %c0_i32_0 = arith.constant 0 : i32
    %c0_i32_1 = arith.constant 0 : i32
    return %c0_i32, %c0_i32_0 : i32, i32
  }
  func.func @transform_5(%arg0: i32) -> (i32, i32, i32) {
    %c0_i32 = arith.constant 0 : i32
    %c0_i32_0 = arith.constant 0 : i32
    %c0_i32_1 = arith.constant 0 : i32
    %c0_i32_2 = arith.constant 0 : i32
    return %c0_i32, %c0_i32_0, %c0_i32_1 : i32, i32, i32
  }
  func.func @transform_6(%arg0: i32) -> (i32, i32) {
    %c0_i32 = arith.constant 0 : i32
    %c0_i32_0 = arith.constant 0 : i32
    %c0_i32_1 = arith.constant 0 : i32
    return %c0_i32, %c0_i32_0 : i32, i32
  }
  func.func @transform_7(%arg0: i32) -> (i32, i32) {
    %c0_i32 = arith.constant 0 : i32
    %c0_i32_0 = arith.constant 0 : i32
    %c0_i32_1 = arith.constant 0 : i32
    return %c0_i32, %c0_i32_0 : i32, i32
  }
  func.func @transform_8(%arg0: i32) -> (i32, i32) {
    %c0_i32 = arith.constant 0 : i32
    %c0_i32_0 = arith.constant 0 : i32
    %c0_i32_1 = arith.constant 0 : i32
    return %c0_i32, %c0_i32_0 : i32, i32
  }
  func.func @transform_9(%arg0: i32) -> (i32, i32) {
    %c0_i32 = arith.constant 0 : i32
    %c0_i32_0 = arith.constant 0 : i32
    %c0_i32_1 = arith.constant 0 : i32
    return %c0_i32, %c0_i32_0 : i32, i32
  }
  func.func @transform_10(%arg0: i32) -> (i32, i32) {
    %c0_i32 = arith.constant 0 : i32
    %c0_i32_0 = arith.constant 0 : i32
    %c0_i32_1 = arith.constant 0 : i32
    return %c0_i32, %c0_i32_0 : i32, i32
  }
  func.func @transform_11(%arg0: i32) -> (i32, i32) {
    %c0_i32 = arith.constant 0 : i32
    %c0_i32_0 = arith.constant 0 : i32
    %c0_i32_1 = arith.constant 0 : i32
    return %c0_i32, %c0_i32_0 : i32, i32
  }
  func.func @transform_12(%arg0: i32) -> (i32, i32) {
    %c0_i32 = arith.constant 0 : i32
    %c0_i32_0 = arith.constant 0 : i32
    %c0_i32_1 = arith.constant 0 : i32
    return %c0_i32, %c0_i32_0 : i32, i32
  }
  func.func @transform_13(%arg0: i32) -> (i32, i32) {
    %c0_i32 = arith.constant 0 : i32
    %c0_i32_0 = arith.constant 0 : i32
    %c0_i32_1 = arith.constant 0 : i32
    return %c0_i32, %c0_i32_0 : i32, i32
  }
}

</mosaic_0001>

<llo_original>
// kernel: relation_network_forward.1
$region0: #{relation_network_forward.1}
  #allocation0 [shape = 'u32[]', space=smem, size = 0x4, offset = 0x4, fixed_abs, tag = 'smem constant byte address 0x4 - core index']
  #allocation1 [shape = 'u32[144,128]{1,0:T(1,128)}', space=vmem, size = 0x12000, scoped, tag = 'internal scratch']
  #allocation2 [shape = 'f32[1,1]{1,0:T(1,128)S(1)}', space=vmem, size = 0x200, scoped, tag = 'scoped memory for relation_network_forward.1']
  #allocation3 [shape = 'f32[1,1]{1,0:T(1,128)S(1)}', space=vmem, size = 0x200, scoped, tag = 'scoped memory for relation_network_forward.1']
  #allocation4 [shape = 'f32[1,1]{1,0:T(1,128)S(1)}', space=vmem, size = 0x200, scoped, tag = 'scoped memory for relation_network_forward.1']
  #allocation5 [shape = 'f32[1,1]{1,0:T(1,128)S(1)}', space=vmem, size = 0x200, scoped, tag = 'scoped memory for relation_network_forward.1']
  %s0 = inlined_call_operand.vmem [shape: f32[100,576], index: 0, kind: input, shape index: {}]
  %s1 = inlined_call_operand.vmem [shape: f32[576,64], index: 1, kind: input, shape index: {}]
  %s2 = inlined_call_operand.vmem [shape: f32[1,64], index: 2, kind: input, shape index: {}]
  %s3 = inlined_call_operand.vmem [shape: f32[1,64], index: 3, kind: input, shape index: {}]
  %s4 = inlined_call_operand.vmem [shape: f32[1,64], index: 4, kind: input, shape index: {}]
  %s5 = inlined_call_operand.vmem [shape: f32[9,64,9], index: 5, kind: input, shape index: {}]
  %s6 = inlined_call_operand.<no memory space> [shape: f32[1,1], index: 6, kind: input, shape index: {}]
  %s7 = inlined_call_operand.<no memory space> [shape: f32[1,1], index: 7, kind: input, shape index: {}]
  %s8 = inlined_call_operand.<no memory space> [shape: f32[1,1], index: 8, kind: input, shape index: {}]
  %s9 = inlined_call_operand.vmem [shape: f32[4,8], index: 9, kind: input, shape index: {}]
  %s10 = inlined_call_operand.vmem [shape: f32[1,8], index: 10, kind: input, shape index: {}]
  %s11 = inlined_call_operand.vmem [shape: f32[1,8], index: 11, kind: input, shape index: {}]
  %s12 = inlined_call_operand.<no memory space> [shape: f32[1,1], index: 12, kind: input, shape index: {}]
  %s13 = inlined_call_operand.vmem [shape: f32[4,1], index: 13, kind: output, shape index: {}]
  %s14 = sld [smem:[#allocation0]]
  $region62: #{relation_network_forward.1} parent=0
    _
  %s16 = ssub.s32 1, %s14
  %s17 = scalar_select 0, %s16, %s14
  %v18 = vstv %s6
  %19 = vst [vmem:[#allocation2] sm:$0x1] %v18
  %v20 = vstv %s7
  %21 = vst [vmem:[#allocation3] sm:$0x1] %v20
  %v22 = vstv %s8
  %23 = vst [vmem:[#allocation4] sm:$0x1] %v22
  %v24 = vstv %s12
  %25 = vst [vmem:[#allocation5] sm:$0x1] %v24
  // Predicated region
  $region2: #{relation_network_forward.1} parent=0 // pred_check
    _
  $region3: #{relation_network_forward.1} parent=0 // pred_check_branch
    %27 = sbr.rel (0) target = $region5
  $region4: #{relation_network_forward.1} parent=0 // pred_region
    _
  $region5: #{relation_network_forward.1} parent=0 // pred_fallthru
    _
  // Predicated region
  $region6: #{relation_network_forward.1} parent=0 // pred_check
    _
  $region7: #{relation_network_forward.1} parent=0 // pred_check_branch
    %29 = sbr.rel (0) target = $region9
  $region8: #{relation_network_forward.1} parent=0 // pred_region
    _
  $region9: #{relation_network_forward.1} parent=0 // pred_fallthru
    _
  // Predicated region
  $region10: #{relation_network_forward.1} parent=0 // pred_check
    _
  $region11: #{relation_network_forward.1} parent=0 // pred_check_branch
    %31 = sbr.rel (0) target = $region13
  $region12: #{relation_network_forward.1} parent=0 // pred_region
    _
  $region13: #{relation_network_forward.1} parent=0 // pred_fallthru
    _
  // Predicated region
  $region14: #{relation_network_forward.1} parent=0 // pred_check
    _
  $region15: #{relation_network_forward.1} parent=0 // pred_check_branch
    %33 = sbr.rel (0) target = $region17
  $region16: #{relation_network_forward.1} parent=0 // pred_region
    _
  $region17: #{relation_network_forward.1} parent=0 // pred_fallthru
    _
  // Predicated region
  $region18: #{relation_network_forward.1} parent=0 // pred_check
    _
  $region19: #{relation_network_forward.1} parent=0 // pred_check_branch
    %35 = sbr.rel (0) target = $region21
  $region20: #{relation_network_forward.1} parent=0 // pred_region
    _
  $region21: #{relation_network_forward.1} parent=0 // pred_fallthru
    _
  // Predicated region
  $region22: #{relation_network_forward.1} parent=0 // pred_check
    _
  $region23: #{relation_network_forward.1} parent=0 // pred_check_branch
    %37 = sbr.rel (0) target = $region25
  $region24: #{relation_network_forward.1} parent=0 // pred_region
    _
  $region25: #{relation_network_forward.1} parent=0 // pred_fallthru
    _
  // Predicated region
  $region26: #{relation_network_forward.1} parent=0 // pred_check
    _
  $region27: #{relation_network_forward.1} parent=0 // pred_check_branch
    %39 = sbr.rel (0) target = $region29
  $region28: #{relation_network_forward.1} parent=0 // pred_region
    _
  $region29: #{relation_network_forward.1} parent=0 // pred_fallthru
    _
  // Predicated region
  $region30: #{relation_network_forward.1} parent=0 // pred_check
    _
  $region31: #{relation_network_forward.1} parent=0 // pred_check_branch
    %41 = sbr.rel (0) target = $region33
  $region32: #{relation_network_forward.1} parent=0 // pred_region
    _
  $region33: #{relation_network_forward.1} parent=0 // pred_fallthru
    _
  // Predicated region
  $region34: #{relation_network_forward.1} parent=0 // pred_check
    _
  $region35: #{relation_network_forward.1} parent=0 // pred_check_branch
    %43 = sbr.rel (0) target = $region37
  $region36: #{relation_network_forward.1} parent=0 // pred_region
    _
  $region37: #{relation_network_forward.1} parent=0 // pred_fallthru
    _
  // Predicated region
  $region38: #{relation_network_forward.1} parent=0 // pred_check
    _
  $region39: #{relation_network_forward.1} parent=0 // pred_check_branch
    %45 = sbr.rel (0) target = $region41
  $region40: #{relation_network_forward.1} parent=0 // pred_region
    _
  $region41: #{relation_network_forward.1} parent=0 // pred_fallthru
    _
  // Predicated region
  $region42: #{relation_network_forward.1} parent=0 // pred_check
    _
  $region43: #{relation_network_forward.1} parent=0 // pred_check_branch
    %47 = sbr.rel (0) target = $region45
  $region44: #{relation_network_forward.1} parent=0 // pred_region
    _
  $region45: #{relation_network_forward.1} parent=0 // pred_fallthru
    _
  // Predicated region
  $region46: #{relation_network_forward.1} parent=0 // pred_check
    _
  $region47: #{relation_network_forward.1} parent=0 // pred_check_branch
    %49 = sbr.rel (0) target = $region49
  $region48: #{relation_network_forward.1} parent=0 // pred_region
    _
  $region49: #{relation_network_forward.1} parent=0 // pred_fallthru
    _
  // Predicated region
  $region50: #{relation_network_forward.1} parent=0 // pred_check
    _
  $region51: #{relation_network_forward.1} parent=0 // pred_check_branch
    %51 = sbr.rel (0) target = $region53
  $region52: #{relation_network_forward.1} parent=0 // pred_region
    _
  $region53: #{relation_network_forward.1} parent=0 // pred_fallthru
    _
  %v52 = vld [vmem:[%s0] sm:$0xff]
  %v53 = vld [vmem:[%s0 + $0x8] sm:$0xff]
  %v54 = vld [vmem:[%s0 + $0x10] sm:$0xff]
  %v55 = vld [vmem:[%s0 + $0x18] sm:$0xff]
  %v56 = vld [vmem:[%s0 + $0x20] sm:$0xff]
  %v57 = vld [vmem:[%s0 + $0x28] sm:$0xff]
  %v58 = vld [vmem:[%s0 + $0x30] sm:$0xff]
  %v59 = vld [vmem:[%s0 + $0x38] sm:$0xff]
  %v60 = vld [vmem:[%s0 + $0x40] sm:$0xff]
  %v61 = vld [vmem:[%s0 + $0x48] sm:$0xff]
  %v62 = vld [vmem:[%s0 + $0x50] sm:$0xff]
  %v63 = vld [vmem:[%s0 + $0x58] sm:$0xff]
  %v64 = vld [vmem:[%s0 + $0x60] sm:$0xff]
  %v65 = vld [vmem:[%s0 + $0x68] sm:$0xff]
  %v66 = vld [vmem:[%s0 + $0x70] sm:$0xff]
  %v67 = vld [vmem:[%s0 + $0x78] sm:$0xff]
  %v68 = vld [vmem:[%s0 + $0x80] sm:$0xff]
  %v69 = vld [vmem:[%s0 + $0x88] sm:$0xff]
  %v70 = vld [vmem:[%s0 + $0x90] sm:$0xff]
  %v71 = vld [vmem:[%s0 + $0x98] sm:$0xff]
  %v72 = vld [vmem:[%s0 + $0xa0] sm:$0xff]
  %v73 = vld [vmem:[%s0 + $0xa8] sm:$0xff]
  %v74 = vld [vmem:[%s0 + $0xb0] sm:$0xff]
  %v75 = vld [vmem:[%s0 + $0xb8] sm:$0xff]
  %v76 = vld [vmem:[%s0 + $0xc0] sm:$0xff]
  %v77 = vld [vmem:[%s0 + $0xc8] sm:$0xff]
  %v78 = vld [vmem:[%s0 + $0xd0] sm:$0xff]
  %v79 = vld [vmem:[%s0 + $0xd8] sm:$0xff]
  %v80 = vld [vmem:[%s0 + $0xe0] sm:$0xff]
  %v81 = vld [vmem:[%s0 + $0xe8] sm:$0xff]
  %v82 = vld [vmem:[%s0 + $0xf0] sm:$0xff]
  %v83 = vld [vmem:[%s0 + $0xf8] sm:$0xff]
  %v84 = vld [vmem:[%s0 + $0x100] sm:$0xff]
  %v85 = vld [vmem:[%s0 + $0x108] sm:$0xff]
  %v86 = vld [vmem:[%s0 + $0x110] sm:$0xff]
  %v87 = vld [vmem:[%s0 + $0x118] sm:$0xff]
  %v88 = vld [vmem:[%s0 + $0x120] sm:$0xff]
  %v89 = vld [vmem:[%s0 + $0x128] sm:$0xff]
  %v90 = vld [vmem:[%s0 + $0x130] sm:$0xff]
  %v91 = vld [vmem:[%s0 + $0x138] sm:$0xff]
  %v92 = vld [vmem:[%s0 + $0x140] sm:$0xff]
  %v93 = vld [vmem:[%s0 + $0x148] sm:$0xff]
  %v94 = vld [vmem:[%s0 + $0x150] sm:$0xff]
  %v95 = vld [vmem:[%s0 + $0x158] sm:$0xff]
  %v96 = vld [vmem:[%s0 + $0x160] sm:$0xff]
  %v97 = vld [vmem:[%s0 + $0x168] sm:$0xff]
  %v98 = vld [vmem:[%s0 + $0x170] sm:$0xff]
  %v99 = vld [vmem:[%s0 + $0x178] sm:$0xff]
  %v100 = vld [vmem:[%s0 + $0x180] sm:$0xff]
  %v101 = vld [vmem:[%s0 + $0x188] sm:$0xff]
  %v102 = vld [vmem:[%s0 + $0x190] sm:$0xff]
  %v103 = vld [vmem:[%s0 + $0x198] sm:$0xff]
  %v104 = vld [vmem:[%s0 + $0x1a0] sm:$0xff]
  %v105 = vld [vmem:[%s0 + $0x1a8] sm:$0xff]
  %v106 = vld [vmem:[%s0 + $0x1b0] sm:$0xff]
  %v107 = vld [vmem:[%s0 + $0x1b8] sm:$0xff]
  %v108 = vld [vmem:[%s0 + $0x1c0] sm:$0xff]
  %v109 = vld [vmem:[%s0 + $0x1c8] sm:$0xff]
  %v110 = vld [vmem:[%s0 + $0x1d0] sm:$0xff]
  %v111 = vld [vmem:[%s0 + $0x1d8] sm:$0xff]
  %v112 = vld [vmem:[%s0 + $0x1e0] sm:$0xf]
  %v113 = vld [vmem:[%s0 + $0x1e8] sm:$0xf]
  %v114 = vld [vmem:[%s0 + $0x1f0] sm:$0xf]
  %v115 = vld [vmem:[%s0 + $0x1f8] sm:$0xf]
  %v116 = vld [vmem:[%s0 + $0x200] sm:$0xf]
  %v117 = vld [vmem:[%s1] sm:$0xff]
  %v118 = vld [vmem:[%s1 + $0x8] sm:$0xff]
  %v119 = vld [vmem:[%s1 + $0x10] sm:$0xff]
  %v120 = vld [vmem:[%s1 + $0x18] sm:$0xff]
  %v121 = vld [vmem:[%s1 + $0x20] sm:$0xff]
  %v122 = vld [vmem:[%s1 + $0x28] sm:$0xff]
  %v123 = vld [vmem:[%s1 + $0x30] sm:$0xff]
  %v124 = vld [vmem:[%s1 + $0x38] sm:$0xff]
  %v125 = vld [vmem:[%s1 + $0x40] sm:$0xff]
  %v126 = vld [vmem:[%s1 + $0x48] sm:$0xff]
  %v127 = vld [vmem:[%s1 + $0x50] sm:$0xff]
  %v128 = vld [vmem:[%s1 + $0x58] sm:$0xff]
  %v129 = vld [vmem:[%s1 + $0x60] sm:$0xff]
  %v130 = vld [vmem:[%s1 + $0x68] sm:$0xff]
  %v131 = vld [vmem:[%s1 + $0x70] sm:$0xff]
  %v132 = vld [vmem:[%s1 + $0x78] sm:$0xff]
  %v133 = vld [vmem:[%s1 + $0x80] sm:$0xff]
  %v134 = vld [vmem:[%s1 + $0x88] sm:$0xff]
  %v135 = vld [vmem:[%s1 + $0x90] sm:$0xff]
  %v136 = vld [vmem:[%s1 + $0x98] sm:$0xff]
  %v137 = vld [vmem:[%s1 + $0xa0] sm:$0xff]
  %v138 = vld [vmem:[%s1 + $0xa8] sm:$0xff]
  %v139 = vld [vmem:[%s1 + $0xb0] sm:$0xff]
  %v140 = vld [vmem:[%s1 + $0xb8] sm:$0xff]
  %v141 = vld [vmem:[%s1 + $0xc0] sm:$0xff]
  %v142 = vld [vmem:[%s1 + $0xc8] sm:$0xff]
  %v143 = vld [vmem:[%s1 + $0xd0] sm:$0xff]
  %v144 = vld [vmem:[%s1 + $0xd8] sm:$0xff]
  %v145 = vld [vmem:[%s1 + $0xe0] sm:$0xff]
  %v146 = vld [vmem:[%s1 + $0xe8] sm:$0xff]
  %v147 = vld [vmem:[%s1 + $0xf0] sm:$0xff]
  %v148 = vld [vmem:[%s1 + $0xf8] sm:$0xff]
  %v149 = vld [vmem:[%s1 + $0x100] sm:$0xff]
  %v150 = vld [vmem:[%s1 + $0x108] sm:$0xff]
  %v151 = vld [vmem:[%s1 + $0x110] sm:$0xff]
  %v152 = vld [vmem:[%s1 + $0x118] sm:$0xff]
  %v153 = vld [vmem:[%s1 + $0x120] sm:$0xff]
  %v154 = vld [vmem:[%s1 + $0x128] sm:$0xff]
  %v155 = vld [vmem:[%s1 + $0x130] sm:$0xff]
  %v156 = vld [vmem:[%s1 + $0x138] sm:$0xff]
  %v157 = vld [vmem:[%s1 + $0x140] sm:$0xff]
  %v158 = vld [vmem:[%s1 + $0x148] sm:$0xff]
  %v159 = vld [vmem:[%s1 + $0x150] sm:$0xff]
  %v160 = vld [vmem:[%s1 + $0x158] sm:$0xff]
  %v161 = vld [vmem:[%s1 + $0x160] sm:$0xff]
  %v162 = vld [vmem:[%s1 + $0x168] sm:$0xff]
  %v163 = vld [vmem:[%s1 + $0x170] sm:$0xff]
  %v164 = vld [vmem:[%s1 + $0x178] sm:$0xff]
  %v165 = vld [vmem:[%s1 + $0x180] sm:$0xff]
  %v166 = vld [vmem:[%s1 + $0x188] sm:$0xff]
  %v167 = vld [vmem:[%s1 + $0x190] sm:$0xff]
  %v168 = vld [vmem:[%s1 + $0x198] sm:$0xff]
  %v169 = vld [vmem:[%s1 + $0x1a0] sm:$0xff]
  %v170 = vld [vmem:[%s1 + $0x1a8] sm:$0xff]
  %v171 = vld [vmem:[%s1 + $0x1b0] sm:$0xff]
  %v172 = vld [vmem:[%s1 + $0x1b8] sm:$0xff]
  %v173 = vld [vmem:[%s1 + $0x1c0] sm:$0xff]
  %v174 = vld [vmem:[%s1 + $0x1c8] sm:$0xff]
  %v175 = vld [vmem:[%s1 + $0x1d0] sm:$0xff]
  %v176 = vld [vmem:[%s1 + $0x1d8] sm:$0xff]
  %v177 = vld [vmem:[%s1 + $0x1e0] sm:$0xff]
  %v178 = vld [vmem:[%s1 + $0x1e8] sm:$0xff]
  %v179 = vld [vmem:[%s1 + $0x1f0] sm:$0xff]
  %v180 = vld [vmem:[%s1 + $0x1f8] sm:$0xff]
  %v181 = vld [vmem:[%s1 + $0x200] sm:$0xff]
  %v182 = vld [vmem:[%s1 + $0x208] sm:$0xff]
  %v183 = vld [vmem:[%s1 + $0x210] sm:$0xff]
  %v184 = vld [vmem:[%s1 + $0x218] sm:$0xff]
  %v185 = vld [vmem:[%s1 + $0x220] sm:$0xff]
  %v186 = vld [vmem:[%s1 + $0x228] sm:$0xff]
  %v187 = vld [vmem:[%s1 + $0x230] sm:$0xff]
  %v188 = vld [vmem:[%s1 + $0x238] sm:$0xff]
  %v189 = vld [vmem:[%s2] sm:$0x1]
  %v191 = vlaneseq
  %v192 = vshrl.u32 %v191, 7
  %v193 = vsub.s32 0, %v192
  %v194 = vrot.slane %v189, %v193
  %vm196 = vcmask 523264
  %v198 = vsel %vm196, %v56, 0
  %v201 = vsel %vm196, %v61, 0
  %v204 = vsel %vm196, %v66, 0
  %v207 = vsel %vm196, %v71, 0
  %v210 = vsel %vm196, %v76, 0
  %v213 = vsel %vm196, %v81, 0
  %v216 = vsel %vm196, %v86, 0
  %v219 = vsel %vm196, %v91, 0
  %v222 = vsel %vm196, %v96, 0
  %v225 = vsel %vm196, %v101, 0
  %v228 = vsel %vm196, %v106, 0
  %v231 = vsel %vm196, %v111, 0
  %v234 = vsel %vm196, %v116, 0
  %236 = vmatprep.subr.mxu0 0.0
  %237 = vmatpush1.msra.mxu0 %v132
  %238 = vmatprep.subr.mxu0 0.0
  %239 = vmatpush1.msra.mxu0 %v131
  %240 = vmatprep.subr.mxu0 0.0
  %241 = vmatpush1.msra.mxu0 %v130
  %242 = vmatprep.subr.mxu0 0.0
  %243 = vmatpush1.msra.mxu0 %v129
  %244 = vmatprep.subr.mxu0 0.0
  %245 = vmatpush1.msra.mxu0 %v128
  %246 = vmatprep.subr.mxu0 0.0
  %247 = vmatpush1.msra.mxu0 %v127
  %248 = vmatprep.subr.mxu0 0.0
  %249 = vmatpush1.msra.mxu0 %v126
  %250 = vmatprep.subr.mxu0 0.0
  %251 = vmatpush1.msra.mxu0 %v125
  %252 = vmatprep.subr.mxu0 0.0
  %253 = vmatpush1.msra.mxu0 %v124
  %254 = vmatprep.subr.mxu0 0.0
  %255 = vmatpush1.msra.mxu0 %v123
  %256 = vmatprep.subr.mxu0 0.0
  %257 = vmatpush1.msra.mxu0 %v122
  %258 = vmatprep.subr.mxu0 0.0
  %259 = vmatpush1.msra.mxu0 %v121
  %260 = vmatprep.subr.mxu0 0.0
  %261 = vmatpush1.msra.mxu0 %v120
  %262 = vmatprep.subr.mxu0 0.0
  %263 = vmatpush1.msra.mxu0 %v119
  %264 = vmatprep.subr.mxu0 0.0
  %265 = vmatpush1.msra.mxu0 %v118
  %266 = vmatprep.subr.mxu0 0.0
  %267 = vmatpush1.msra.mxu0 %v117
  %268 = vmatprep.subr.mxu0 0.0
  %269 = vmatpush2.msra.mxu0 %v148
  %270 = vmatprep.subr.mxu0 0.0
  %271 = vmatpush2.msra.mxu0 %v147
  %272 = vmatprep.subr.mxu0 0.0
  %273 = vmatpush2.msra.mxu0 %v146
  %274 = vmatprep.subr.mxu0 0.0
  %275 = vmatpush2.msra.mxu0 %v145
  %276 = vmatprep.subr.mxu0 0.0
  %277 = vmatpush2.msra.mxu0 %v144
  %278 = vmatprep.subr.mxu0 0.0
  %279 = vmatpush2.msra.mxu0 %v143
  %280 = vmatprep.subr.mxu0 0.0
  %281 = vmatpush2.msra.mxu0 %v142
  %282 = vmatprep.subr.mxu0 0.0
  %283 = vmatpush2.msra.mxu0 %v141
  %284 = vmatprep.subr.mxu0 0.0
  %285 = vmatpush2.msra.mxu0 %v140
  %286 = vmatprep.subr.mxu0 0.0
  %287 = vmatpush2.msra.mxu0 %v139
  %288 = vmatprep.subr.mxu0 0.0
  %289 = vmatpush2.msra.mxu0 %v138
  %290 = vmatprep.subr.mxu0 0.0
  %291 = vmatpush2.msra.mxu0 %v137
  %292 = vmatprep.subr.mxu0 0.0
  %293 = vmatpush2.msra.mxu0 %v136
  %294 = vmatprep.subr.mxu0 0.0
  %295 = vmatpush2.msra.mxu0 %v135
  %296 = vmatprep.subr.mxu0 0.0
  %297 = vmatpush2.msra.mxu0 %v134
  %298 = vmatprep.subr.mxu0 0.0
  %299 = vmatpush2.msra.mxu0 %v133
  %300 = vmatprep.mubr.f32.mxu0 %v53
  %301 = vmatmul.mubr.f32.gmra.mxu0 %v52
  %v302 = vpop.f32.mrf.mxu0
  %v303 = vadd.f32 %v194, %v302
  %v304 = vpop.f32.mrf.mxu0
  %305 = vmatprep.mubr.f32.mxu0 %v58
  %306 = vmatmul.mubr.f32.gmra.mxu0 %v57
  %v307 = vpop.f32.mrf.mxu0
  %v308 = vadd.f32 %v194, %v307
  %v309 = vpop.f32.mrf.mxu0
  %310 = vmatprep.mubr.f32.mxu0 %v63
  %311 = vmatmul.mubr.f32.gmra.mxu0 %v62
  %v312 = vpop.f32.mrf.mxu0
  %v313 = vadd.f32 %v194, %v312
  %v314 = vpop.f32.mrf.mxu0
  %315 = vmatprep.mubr.f32.mxu0 %v68
  %316 = vmatmul.mubr.f32.gmra.mxu0 %v67
  %v317 = vpop.f32.mrf.mxu0
  %v318 = vadd.f32 %v194, %v317
  %v319 = vpop.f32.mrf.mxu0
  %320 = vmatprep.mubr.f32.mxu0 %v73
  %321 = vmatmul.mubr.f32.gmra.mxu0 %v72
  %v322 = vpop.f32.mrf.mxu0
  %v323 = vadd.f32 %v194, %v322
  %v324 = vpop.f32.mrf.mxu0
  %325 = vmatprep.mubr.f32.mxu0 %v78
  %326 = vmatmul.mubr.f32.gmra.mxu0 %v77
  %v327 = vpop.f32.mrf.mxu0
  %v328 = vadd.f32 %v194, %v327
  %v329 = vpop.f32.mrf.mxu0
  %330 = vmatprep.mubr.f32.mxu0 %v83
  %331 = vmatmul.mubr.f32.gmra.mxu0 %v82
  %v332 = vpop.f32.mrf.mxu0
  %v333 = vadd.f32 %v194, %v332
  %v334 = vpop.f32.mrf.mxu0
  %335 = vmatprep.mubr.f32.mxu0 %v88
  %336 = vmatmul.mubr.f32.gmra.mxu0 %v87
  %v337 = vpop.f32.mrf.mxu0
  %v338 = vadd.f32 %v194, %v337
  %v339 = vpop.f32.mrf.mxu0
  %340 = vmatprep.mubr.f32.mxu0 %v93
  %341 = vmatmul.mubr.f32.gmra.mxu0 %v92
  %v342 = vpop.f32.mrf.mxu0
  %v343 = vadd.f32 %v194, %v342
  %v344 = vpop.f32.mrf.mxu0
  %345 = vmatprep.mubr.f32.mxu0 %v98
  %346 = vmatmul.mubr.f32.gmra.mxu0 %v97
  %v347 = vpop.f32.mrf.mxu0
  %v348 = vadd.f32 %v194, %v347
  %v349 = vpop.f32.mrf.mxu0
  %350 = vmatprep.mubr.f32.mxu0 %v103
  %351 = vmatmul.mubr.f32.gmra.mxu0 %v102
  %v352 = vpop.f32.mrf.mxu0
  %v353 = vadd.f32 %v194, %v352
  %v354 = vpop.f32.mrf.mxu0
  %355 = vmatprep.mubr.f32.mxu0 %v108
  %356 = vmatmul.mubr.f32.gmra.mxu0 %v107
  %v357 = vpop.f32.mrf.mxu0
  %v358 = vadd.f32 %v194, %v357
  %v359 = vpop.f32.mrf.mxu0
  %360 = vmatprep.mubr.f32.mxu0 %v113
  %361 = vmatmul.mubr.f32.gmra.mxu0 %v112
  %v362 = vpop.f32.mrf.mxu0
  %v363 = vadd.f32 %v194, %v362
  %v364 = vpop.f32.mrf.mxu0
  %365 = vdwg.mxu0
  %366 = vmatprep.subr.mxu0 0.0
  %367 = vmatpush1.msra.mxu0 %v164
  %368 = vmatprep.subr.mxu0 0.0
  %369 = vmatpush1.msra.mxu0 %v163
  %370 = vmatprep.subr.mxu0 0.0
  %371 = vmatpush1.msra.mxu0 %v162
  %372 = vmatprep.subr.mxu0 0.0
  %373 = vmatpush1.msra.mxu0 %v161
  %374 = vmatprep.subr.mxu0 0.0
  %375 = vmatpush1.msra.mxu0 %v160
  %376 = vmatprep.subr.mxu0 0.0
  %377 = vmatpush1.msra.mxu0 %v159
  %378 = vmatprep.subr.mxu0 0.0
  %379 = vmatpush1.msra.mxu0 %v158
  %380 = vmatprep.subr.mxu0 0.0
  %381 = vmatpush1.msra.mxu0 %v157
  %382 = vmatprep.subr.mxu0 0.0
  %383 = vmatpush1.msra.mxu0 %v156
  %384 = vmatprep.subr.mxu0 0.0
  %385 = vmatpush1.msra.mxu0 %v155
  %386 = vmatprep.subr.mxu0 0.0
  %387 = vmatpush1.msra.mxu0 %v154
  %388 = vmatprep.subr.mxu0 0.0
  %389 = vmatpush1.msra.mxu0 %v153
  %390 = vmatprep.subr.mxu0 0.0
  %391 = vmatpush1.msra.mxu0 %v152
  %392 = vmatprep.subr.mxu0 0.0
  %393 = vmatpush1.msra.mxu0 %v151
  %394 = vmatprep.subr.mxu0 0.0
  %395 = vmatpush1.msra.mxu0 %v150
  %396 = vmatprep.subr.mxu0 0.0
  %397 = vmatpush1.msra.mxu0 %v149
  %398 = vmatprep.subr.mxu0 0.0
  %399 = vmatpush2.msra.mxu0 %v180
  %400 = vmatprep.subr.mxu0 0.0
  %401 = vmatpush2.msra.mxu0 %v179
  %402 = vmatprep.subr.mxu0 0.0
  %403 = vmatpush2.msra.mxu0 %v178
  %404 = vmatprep.subr.mxu0 0.0
  %405 = vmatpush2.msra.mxu0 %v177
  %406 = vmatprep.subr.mxu0 0.0
  %407 = vmatpush2.msra.mxu0 %v176
  %408 = vmatprep.subr.mxu0 0.0
  %409 = vmatpush2.msra.mxu0 %v175
  %410 = vmatprep.subr.mxu0 0.0
  %411 = vmatpush2.msra.mxu0 %v174
  %412 = vmatprep.subr.mxu0 0.0
  %413 = vmatpush2.msra.mxu0 %v173
  %414 = vmatprep.subr.mxu0 0.0
  %415 = vmatpush2.msra.mxu0 %v172
  %416 = vmatprep.subr.mxu0 0.0
  %417 = vmatpush2.msra.mxu0 %v171
  %418 = vmatprep.subr.mxu0 0.0
  %419 = vmatpush2.msra.mxu0 %v170
  %420 = vmatprep.subr.mxu0 0.0
  %421 = vmatpush2.msra.mxu0 %v169
  %422 = vmatprep.subr.mxu0 0.0
  %423 = vmatpush2.msra.mxu0 %v168
  %424 = vmatprep.subr.mxu0 0.0
  %425 = vmatpush2.msra.mxu0 %v167
  %426 = vmatprep.subr.mxu0 0.0
  %427 = vmatpush2.msra.mxu0 %v166
  %428 = vmatprep.subr.mxu0 0.0
  %429 = vmatpush2.msra.mxu0 %v165
  %430 = vmatprep.mubr.f32.mxu0 %v55
  %431 = vmatmul.mubr.f32.gmra.mxu0 %v54
  %v432 = vpop.f32.mrf.mxu0
  %v433 = vadd.f32 %v303, %v432
  %v434 = vpop.f32.mrf.mxu0
  %435 = vmatprep.mubr.f32.mxu0 %v60
  %436 = vmatmul.mubr.f32.gmra.mxu0 %v59
  %v437 = vpop.f32.mrf.mxu0
  %v438 = vadd.f32 %v308, %v437
  %v439 = vpop.f32.mrf.mxu0
  %440 = vmatprep.mubr.f32.mxu0 %v65
  %441 = vmatmul.mubr.f32.gmra.mxu0 %v64
  %v442 = vpop.f32.mrf.mxu0
  %v443 = vadd.f32 %v313, %v442
  %v444 = vpop.f32.mrf.mxu0
  %445 = vmatprep.mubr.f32.mxu0 %v70
  %446 = vmatmul.mubr.f32.gmra.mxu0 %v69
  %v447 = vpop.f32.mrf.mxu0
  %v448 = vadd.f32 %v318, %v447
  %v449 = vpop.f32.mrf.mxu0
  %450 = vmatprep.mubr.f32.mxu0 %v75
  %451 = vmatmul.mubr.f32.gmra.mxu0 %v74
  %v452 = vpop.f32.mrf.mxu0
  %v453 = vadd.f32 %v323, %v452
  %v454 = vpop.f32.mrf.mxu0
  %455 = vmatprep.mubr.f32.mxu0 %v80
  %456 = vmatmul.mubr.f32.gmra.mxu0 %v79
  %v457 = vpop.f32.mrf.mxu0
  %v458 = vadd.f32 %v328, %v457
  %v459 = vpop.f32.mrf.mxu0
  %460 = vmatprep.mubr.f32.mxu0 %v85
  %461 = vmatmul.mubr.f32.gmra.mxu0 %v84
  %v462 = vpop.f32.mrf.mxu0
  %v463 = vadd.f32 %v333, %v462
  %v464 = vpop.f32.mrf.mxu0
  %465 = vmatprep.mubr.f32.mxu0 %v90
  %466 = vmatmul.mubr.f32.gmra.mxu0 %v89
  %v467 = vpop.f32.mrf.mxu0
  %v468 = vadd.f32 %v338, %v467
  %v469 = vpop.f32.mrf.mxu0
  %470 = vmatprep.mubr.f32.mxu0 %v95
  %471 = vmatmul.mubr.f32.gmra.mxu0 %v94
  %v472 = vpop.f32.mrf.mxu0
  %v473 = vadd.f32 %v343, %v472
  %v474 = vpop.f32.mrf.mxu0
  %475 = vmatprep.mubr.f32.mxu0 %v100
  %476 = vmatmul.mubr.f32.gmra.mxu0 %v99
  %v477 = vpop.f32.mrf.mxu0
  %v478 = vadd.f32 %v348, %v477
  %v479 = vpop.f32.mrf.mxu0
  %480 = vmatprep.mubr.f32.mxu0 %v105
  %481 = vmatmul.mubr.f32.gmra.mxu0 %v104
  %v482 = vpop.f32.mrf.mxu0
  %v483 = vadd.f32 %v353, %v482
  %v484 = vpop.f32.mrf.mxu0
  %485 = vmatprep.mubr.f32.mxu0 %v110
  %486 = vmatmul.mubr.f32.gmra.mxu0 %v109
  %v487 = vpop.f32.mrf.mxu0
  %v488 = vadd.f32 %v358, %v487
  %v489 = vpop.f32.mrf.mxu0
  %490 = vmatprep.mubr.f32.mxu0 %v115
  %491 = vmatmul.mubr.f32.gmra.mxu0 %v114
  %v492 = vpop.f32.mrf.mxu0
  %v493 = vadd.f32 %v363, %v492
  %v494 = vpop.f32.mrf.mxu0
  %495 = vdwg.mxu0
  %496 = vmatprep.subr.mxu0 0.0
  %497 = vmatpush1.msra.mxu0 0.0
  %498 = vmatprep.subr.mxu0 0.0
  %499 = vmatpush1.msra.mxu0 0.0
  %500 = vmatprep.subr.mxu0 0.0
  %501 = vmatpush1.msra.mxu0 0.0
  %502 = vmatprep.subr.mxu0 0.0
  %503 = vmatpush1.msra.mxu0 0.0
  %504 = vmatprep.subr.mxu0 0.0
  %505 = vmatpush1.msra.mxu0 0.0
  %506 = vmatprep.subr.mxu0 0.0
  %507 = vmatpush1.msra.mxu0 0.0
  %508 = vmatprep.subr.mxu0 0.0
  %509 = vmatpush1.msra.mxu0 0.0
  %510 = vmatprep.subr.mxu0 0.0
  %511 = vmatpush1.msra.mxu0 0.0
  %512 = vmatprep.subr.mxu0 0.0
  %513 = vmatpush1.msra.mxu0 %v188
  %514 = vmatprep.subr.mxu0 0.0
  %515 = vmatpush1.msra.mxu0 %v187
  %516 = vmatprep.subr.mxu0 0.0
  %517 = vmatpush1.msra.mxu0 %v186
  %518 = vmatprep.subr.mxu0 0.0
  %519 = vmatpush1.msra.mxu0 %v185
  %520 = vmatprep.subr.mxu0 0.0
  %521 = vmatpush1.msra.mxu0 %v184
  %522 = vmatprep.subr.mxu0 0.0
  %523 = vmatpush1.msra.mxu0 %v183
  %524 = vmatprep.subr.mxu0 0.0
  %525 = vmatpush1.msra.mxu0 %v182
  %526 = vmatprep.subr.mxu0 0.0
  %527 = vmatpush1.msra.mxu0 %v181
  %528 = vmatprep.subr.mxu0 0.0
  %529 = vmatpush2.msra.mxu0 0.0
  %530 = vmatprep.subr.mxu0 0.0
  %531 = vmatpush2.msra.mxu0 0.0
  %532 = vmatprep.subr.mxu0 0.0
  %533 = vmatpush2.msra.mxu0 0.0
  %534 = vmatprep.subr.mxu0 0.0
  %535 = vmatpush2.msra.mxu0 0.0
  %536 = vmatprep.subr.mxu0 0.0
  %537 = vmatpush2.msra.mxu0 0.0
  %538 = vmatprep.subr.mxu0 0.0
  %539 = vmatpush2.msra.mxu0 0.0
  %540 = vmatprep.subr.mxu0 0.0
  %541 = vmatpush2.msra.mxu0 0.0
  %542 = vmatprep.subr.mxu0 0.0
  %543 = vmatpush2.msra.mxu0 0.0
  %544 = vmatprep.subr.mxu0 0.0
  %545 = vmatpush2.msra.mxu0 0.0
  %546 = vmatprep.subr.mxu0 0.0
  %547 = vmatpush2.msra.mxu0 0.0
  %548 = vmatprep.subr.mxu0 0.0
  %549 = vmatpush2.msra.mxu0 0.0
  %550 = vmatprep.subr.mxu0 0.0
  %551 = vmatpush2.msra.mxu0 0.0
  %552 = vmatprep.subr.mxu0 0.0
  %553 = vmatpush2.msra.mxu0 0.0
  %554 = vmatprep.subr.mxu0 0.0
  %555 = vmatpush2.msra.mxu0 0.0
  %556 = vmatprep.subr.mxu0 0.0
  %557 = vmatpush2.msra.mxu0 0.0
  %558 = vmatprep.subr.mxu0 0.0
  %559 = vmatpush2.msra.mxu0 0.0
  %560 = vmatprep.mubr.f32.mxu0 0.0
  %561 = vmatmul.mubr.f32.gmra.mxu0 %v198
  %v562 = vpop.f32.mrf.mxu0
  %v563 = vadd.f32 %v433, %v562
  %v564 = vpop.f32.mrf.mxu0
  %565 = vmatprep.mubr.f32.mxu0 0.0
  %566 = vmatmul.mubr.f32.gmra.mxu0 %v201
  %v567 = vpop.f32.mrf.mxu0
  %v568 = vadd.f32 %v438, %v567
  %v569 = vpop.f32.mrf.mxu0
  %570 = vmatprep.mubr.f32.mxu0 0.0
  %571 = vmatmul.mubr.f32.gmra.mxu0 %v204
  %v572 = vpop.f32.mrf.mxu0
  %v573 = vadd.f32 %v443, %v572
  %v574 = vpop.f32.mrf.mxu0
  %575 = vmatprep.mubr.f32.mxu0 0.0
  %576 = vmatmul.mubr.f32.gmra.mxu0 %v207
  %v577 = vpop.f32.mrf.mxu0
  %v578 = vadd.f32 %v448, %v577
  %v579 = vpop.f32.mrf.mxu0
  %580 = vmatprep.mubr.f32.mxu0 0.0
  %581 = vmatmul.mubr.f32.gmra.mxu0 %v210
  %v582 = vpop.f32.mrf.mxu0
  %v583 = vadd.f32 %v453, %v582
  %v584 = vpop.f32.mrf.mxu0
  %585 = vmatprep.mubr.f32.mxu0 0.0
  %586 = vmatmul.mubr.f32.gmra.mxu0 %v213
  %v587 = vpop.f32.mrf.mxu0
  %v588 = vadd.f32 %v458, %v587
  %v589 = vpop.f32.mrf.mxu0
  %590 = vmatprep.mubr.f32.mxu0 0.0
  %591 = vmatmul.mubr.f32.gmra.mxu0 %v216
  %v592 = vpop.f32.mrf.mxu0
  %v593 = vadd.f32 %v463, %v592
  %v594 = vpop.f32.mrf.mxu0
  %595 = vmatprep.mubr.f32.mxu0 0.0
  %596 = vmatmul.mubr.f32.gmra.mxu0 %v219
  %v597 = vpop.f32.mrf.mxu0
  %v598 = vadd.f32 %v468, %v597
  %v599 = vpop.f32.mrf.mxu0
  %600 = vmatprep.mubr.f32.mxu0 0.0
  %601 = vmatmul.mubr.f32.gmra.mxu0 %v222
  %v602 = vpop.f32.mrf.mxu0
  %v603 = vadd.f32 %v473, %v602
  %v604 = vpop.f32.mrf.mxu0
  %605 = vmatprep.mubr.f32.mxu0 0.0
  %606 = vmatmul.mubr.f32.gmra.mxu0 %v225
  %v607 = vpop.f32.mrf.mxu0
  %v608 = vadd.f32 %v478, %v607
  %v609 = vpop.f32.mrf.mxu0
  %610 = vmatprep.mubr.f32.mxu0 0.0
  %611 = vmatmul.mubr.f32.gmra.mxu0 %v228
  %v612 = vpop.f32.mrf.mxu0
  %v613 = vadd.f32 %v483, %v612
  %v614 = vpop.f32.mrf.mxu0
  %615 = vmatprep.mubr.f32.mxu0 0.0
  %616 = vmatmul.mubr.f32.gmra.mxu0 %v231
  %v617 = vpop.f32.mrf.mxu0
  %v618 = vadd.f32 %v488, %v617
  %v619 = vpop.f32.mrf.mxu0
  %620 = vmatprep.mubr.f32.mxu0 0.0
  %621 = vmatmul.mubr.f32.gmra.mxu0 %v234
  %v622 = vpop.f32.mrf.mxu0
  %v623 = vadd.f32 %v493, %v622
  %v624 = vpop.f32.mrf.mxu0
  %625 = vdwg.mxu0
  %v626 = vsel %vm196, %v563, 0.0
  %v627 = vsel %vm196, %v568, 0.0
  %v628 = vadd.f32 %v626, %v627
  %v629 = vsel %vm196, %v573, 0.0
  %v630 = vadd.f32 %v628, %v629
  %v631 = vsel %vm196, %v578, 0.0
  %v632 = vadd.f32 %v630, %v631
  %v633 = vsel %vm196, %v583, 0.0
  %v634 = vadd.f32 %v632, %v633
  %v635 = vsel %vm196, %v588, 0.0
  %v636 = vadd.f32 %v634, %v635
  %v637 = vsel %vm196, %v593, 0.0
  %v638 = vadd.f32 %v636, %v637
  %v639 = vsel %vm196, %v598, 0.0
  %v640 = vadd.f32 %v638, %v639
  %v641 = vsel %vm196, %v603, 0.0
  %v642 = vadd.f32 %v640, %v641
  %v643 = vsel %vm196, %v608, 0.0
  %v644 = vadd.f32 %v642, %v643
  %v645 = vsel %vm196, %v613, 0.0
  %v646 = vadd.f32 %v644, %v645
  %v647 = vsel %vm196, %v618, 0.0
  %v648 = vadd.f32 %v646, %v647
  %vm649 = vcmask 519168
  %v650 = vsel %vm649, %v623, 0.0
  %v651 = vadd.f32 %v648, %v650
  %v652 = vrot.slane %v651, 4
  %v653 = vadd.f32 %v651, %v652
  %v654 = vrot.slane %v653, 2
  %v655 = vadd.f32 %v653, %v654
  %v656 = vrot.slane %v655, 1
  %v657 = vadd.f32 %v655, %v656
  %v658 = vrcp.pop 100.0
  %v659 = vmul.f32 %v657, %v658
  %v660 = vsub.f32 %v563, %v659
  %v661 = vsub.f32 %v568, %v659
  %v662 = vsub.f32 %v573, %v659
  %v663 = vsub.f32 %v578, %v659
  %v664 = vsub.f32 %v583, %v659
  %v665 = vsub.f32 %v588, %v659
  %v666 = vsub.f32 %v593, %v659
  %v667 = vsub.f32 %v598, %v659
  %v668 = vsub.f32 %v603, %v659
  %v669 = vsub.f32 %v608, %v659
  %v670 = vsub.f32 %v613, %v659
  %v671 = vsub.f32 %v618, %v659
  %v672 = vsub.f32 %v623, %v659
  %v673 = vmul.f32 %v660, %v660
  %v674 = vmul.f32 %v661, %v661
  %v675 = vmul.f32 %v662, %v662
  %v676 = vmul.f32 %v663, %v663
  %v677 = vmul.f32 %v664, %v664
  %v678 = vmul.f32 %v665, %v665
  %v679 = vmul.f32 %v666, %v666
  %v680 = vmul.f32 %v667, %v667
  %v681 = vmul.f32 %v668, %v668
  %v682 = vmul.f32 %v669, %v669
  %v683 = vmul.f32 %v670, %v670
  %v684 = vmul.f32 %v671, %v671
  %v685 = vmul.f32 %v672, %v672
  %v686 = vsel %vm196, %v673, 0.0
  %v687 = vsel %vm196, %v674, 0.0
  %v688 = vadd.f32 %v686, %v687
  %v689 = vsel %vm196, %v675, 0.0
  %v690 = vadd.f32 %v688, %v689
  %v691 = vsel %vm196, %v676, 0.0
  %v692 = vadd.f32 %v690, %v691
  %v693 = vsel %vm196, %v677, 0.0
  %v694 = vadd.f32 %v692, %v693
  %v695 = vsel %vm196, %v678, 0.0
  %v696 = vadd.f32 %v694, %v695
  %v697 = vsel %vm196, %v679, 0.0
  %v698 = vadd.f32 %v696, %v697
  %v699 = vsel %vm196, %v680, 0.0
  %v700 = vadd.f32 %v698, %v699
  %v701 = vsel %vm196, %v681, 0.0
  %v702 = vadd.f32 %v700, %v701
  %v703 = vsel %vm196, %v682, 0.0
  %v704 = vadd.f32 %v702, %v703
  %v705 = vsel %vm196, %v683, 0.0
  %v706 = vadd.f32 %v704, %v705
  %v707 = vsel %vm196, %v684, 0.0
  %v708 = vadd.f32 %v706, %v707
  %v709 = vsel %vm649, %v685, 0.0
  %v710 = vadd.f32 %v708, %v709
  %v711 = vrot.slane %v710, 4
  %v712 = vadd.f32 %v710, %v711
  %v713 = vrot.slane %v712, 2
  %v714 = vadd.f32 %v712, %v713
  %v715 = vrot.slane %v714, 1
  %v716 = vadd.f32 %v714, %v715
  %v717 = vmul.f32 %v716, %v658
  %v718 = vld [vmem:[%s3] sm:$0x1]
  %v719 = vadd.f32 %v717, 1e-05
  %v720 = vrsqrt.pop %v719
  %v721 = vmul.f32 %v718, %v720
  %v722 = vld [vmem:[%s4] sm:$0x1]
  %v723 = vmul.f32 %v659, %v721
  %v724 = vsub.f32 %v722, %v723
  %v726 = vlaneseq
  %v727 = vshrl.u32 %v726, 7
  %v728 = vsub.s32 0, %v727
  %v729 = vrot.slane %v721, %v728
  %v731 = vmul.f32 %v563, %v729
  %v732 = vmul.f32 %v568, %v729
  %v733 = vmul.f32 %v573, %v729
  %v734 = vmul.f32 %v578, %v729
  %v735 = vmul.f32 %v583, %v729
  %v736 = vmul.f32 %v588, %v729
  %v737 = vmul.f32 %v593, %v729
  %v738 = vmul.f32 %v598, %v729
  %v739 = vmul.f32 %v603, %v729
  %v740 = vmul.f32 %v608, %v729
  %v741 = vmul.f32 %v613, %v729
  %v742 = vmul.f32 %v618, %v729
  %v743 = vmul.f32 %v623, %v729
  %v745 = vlaneseq
  %v746 = vshrl.u32 %v745, 7
  %v747 = vsub.s32 0, %v746
  %v748 = vrot.slane %v724, %v747
  %v750 = vadd.f32 %v731, %v748
  %v751 = vadd.f32 %v732, %v748
  %v752 = vadd.f32 %v733, %v748
  %v753 = vadd.f32 %v734, %v748
  %v754 = vadd.f32 %v735, %v748
  %v755 = vadd.f32 %v736, %v748
  %v756 = vadd.f32 %v737, %v748
  %v757 = vadd.f32 %v738, %v748
  %v758 = vadd.f32 %v739, %v748
  %v759 = vadd.f32 %v740, %v748
  %v760 = vadd.f32 %v741, %v748
  %v761 = vadd.f32 %v742, %v748
  %v762 = vadd.f32 %v743, %v748
  %v763 = vmax.f32 %v750, 0.0
  %v764 = vmax.f32 %v751, 0.0
  %v765 = vmax.f32 %v752, 0.0
  %v766 = vmax.f32 %v753, 0.0
  %v767 = vmax.f32 %v754, 0.0
  %v768 = vmax.f32 %v755, 0.0
  %v769 = vmax.f32 %v756, 0.0
  %v770 = vmax.f32 %v757, 0.0
  %v771 = vmax.f32 %v758, 0.0
  %v772 = vmax.f32 %v759, 0.0
  %v773 = vmax.f32 %v760, 0.0
  %v774 = vmax.f32 %v761, 0.0
  %v775 = vmax.f32 %v762, 0.0
  %v777 = vrot.slane %v764, 4
  %v779 = vmax.f32 %v763, %v777
  %v781 = vrot.slane %v765, 4
  %v783 = vmax.f32 %v764, %v781
  %v785 = vrot.slane %v768, 4
  %v787 = vmax.f32 %v765, %v785
  %v789 = vrot.slane %v766, 4
  %v791 = vmax.f32 %v766, %v789
  %v792 = vmax.f32 %v791, %v785
  %v793 = vmax.f32 %v792, %v769
  %v795 = vrot.slane %v767, 4
  %v797 = vmax.f32 %v767, %v795
  %v799 = vrot.slane %v769, 4
  %v801 = vmax.f32 %v797, %v799
  %v802 = vmax.f32 %v801, %v770
  %v804 = vrot.slane %v773, 4
  %v806 = vmax.f32 %v770, %v804
  %v808 = vrot.slane %v771, 4
  %v810 = vmax.f32 %v771, %v808
  %v811 = vmax.f32 %v810, %v804
  %v812 = vmax.f32 %v811, %v774
  %v814 = vrot.slane %v772, 4
  %v816 = vmax.f32 %v772, %v814
  %v818 = vrot.slane %v774, 4
  %v820 = vmax.f32 %v816, %v818
  %v821 = vmax.f32 %v820, %v775
  %v822 = vld [vmem:[%s5] sm:$0xff]
  %v823 = vld [vmem:[%s5 + $0x8] sm:$0xff]
  %v824 = vld [vmem:[%s5 + $0x10] sm:$0xff]
  %v825 = vld [vmem:[%s5 + $0x18] sm:$0xff]
  %v826 = vld [vmem:[%s5 + $0x20] sm:$0xff]
  %v827 = vld [vmem:[%s5 + $0x28] sm:$0xff]
  %v828 = vld [vmem:[%s5 + $0x30] sm:$0xff]
  %v829 = vld [vmem:[%s5 + $0x38] sm:$0xff]
  %s830 = scalar_lea.vmem %s5, 64
  %v831 = vld [vmem:[%s830] sm:$0xff]
  %v832 = vld [vmem:[%s830 + $0x8] sm:$0xff]
  %v833 = vld [vmem:[%s830 + $0x10] sm:$0xff]
  %v834 = vld [vmem:[%s830 + $0x18] sm:$0xff]
  %v835 = vld [vmem:[%s830 + $0x20] sm:$0xff]
  %v836 = vld [vmem:[%s830 + $0x28] sm:$0xff]
  %v837 = vld [vmem:[%s830 + $0x30] sm:$0xff]
  %v838 = vld [vmem:[%s830 + $0x38] sm:$0xff]
  %v840 = vrot.slane %v779, 4
  %v841 = vsel %vm196, %v840, 0
  %843 = vmatprep.subr.mxu0 0.0
  %844 = vmatpush1.msra.mxu0 0.0
  %845 = vmatprep.subr.mxu0 0.0
  %846 = vmatpush1.msra.mxu0 0.0
  %847 = vmatprep.subr.mxu0 0.0
  %848 = vmatpush1.msra.mxu0 0.0
  %849 = vmatprep.subr.mxu0 0.0
  %850 = vmatpush1.msra.mxu0 0.0
  %851 = vmatprep.subr.mxu0 0.0
  %852 = vmatpush1.msra.mxu0 0.0
  %853 = vmatprep.subr.mxu0 0.0
  %854 = vmatpush1.msra.mxu0 0.0
  %855 = vmatprep.subr.mxu0 0.0
  %856 = vmatpush1.msra.mxu0 0.0
  %857 = vmatprep.subr.mxu0 0.0
  %858 = vmatpush1.msra.mxu0 0.0
  %859 = vmatprep.subr.mxu0 0.0
  %860 = vmatpush1.msra.mxu0 %v838
  %861 = vmatprep.subr.mxu0 0.0
  %862 = vmatpush1.msra.mxu0 %v837
  %863 = vmatprep.subr.mxu0 0.0
  %864 = vmatpush1.msra.mxu0 %v836
  %865 = vmatprep.subr.mxu0 0.0
  %866 = vmatpush1.msra.mxu0 %v835
  %867 = vmatprep.subr.mxu0 0.0
  %868 = vmatpush1.msra.mxu0 %v834
  %869 = vmatprep.subr.mxu0 0.0
  %870 = vmatpush1.msra.mxu0 %v833
  %871 = vmatprep.subr.mxu0 0.0
  %872 = vmatpush1.msra.mxu0 %v832
  %873 = vmatprep.subr.mxu0 0.0
  %874 = vmatpush1.msra.mxu0 %v831
  %875 = vmatprep.subr.mxu0 0.0
  %876 = vmatpush2.msra.mxu0 0.0
  %877 = vmatprep.subr.mxu0 0.0
  %878 = vmatpush2.msra.mxu0 0.0
  %879 = vmatprep.subr.mxu0 0.0
  %880 = vmatpush2.msra.mxu0 0.0
  %881 = vmatprep.subr.mxu0 0.0
  %882 = vmatpush2.msra.mxu0 0.0
  %883 = vmatprep.subr.mxu0 0.0
  %884 = vmatpush2.msra.mxu0 0.0
  %885 = vmatprep.subr.mxu0 0.0
  %886 = vmatpush2.msra.mxu0 0.0
  %887 = vmatprep.subr.mxu0 0.0
  %888 = vmatpush2.msra.mxu0 0.0
  %889 = vmatprep.subr.mxu0 0.0
  %890 = vmatpush2.msra.mxu0 0.0
  %891 = vmatprep.subr.mxu0 0.0
  %892 = vmatpush2.msra.mxu0 0.0
  %893 = vmatprep.subr.mxu0 0.0
  %894 = vmatpush2.msra.mxu0 0.0
  %895 = vmatprep.subr.mxu0 0.0
  %896 = vmatpush2.msra.mxu0 0.0
  %897 = vmatprep.subr.mxu0 0.0
  %898 = vmatpush2.msra.mxu0 0.0
  %899 = vmatprep.subr.mxu0 0.0
  %900 = vmatpush2.msra.mxu0 0.0
  %901 = vmatprep.subr.mxu0 0.0
  %902 = vmatpush2.msra.mxu0 0.0
  %903 = vmatprep.subr.mxu0 0.0
  %904 = vmatpush2.msra.mxu0 0.0
  %905 = vmatprep.subr.mxu0 0.0
  %906 = vmatpush2.msra.mxu0 0.0
  %907 = vmatprep.mubr.f32.mxu0 0.0
  %908 = vmatmul.mubr.f32.gmra.mxu0 %v841
  %v909 = vpop.f32.mrf.mxu0
  %v910 = vadd.f32 0.0, %v909
  %v911 = vpop.f32.mrf.mxu0
  %912 = vdwg.mxu0
  %v914 = vsel %vm196, %v763, 0
  %916 = vmatprep.subr.mxu0 0.0
  %917 = vmatpush1.msra.mxu0 0.0
  %918 = vmatprep.subr.mxu0 0.0
  %919 = vmatpush1.msra.mxu0 0.0
  %920 = vmatprep.subr.mxu0 0.0
  %921 = vmatpush1.msra.mxu0 0.0
  %922 = vmatprep.subr.mxu0 0.0
  %923 = vmatpush1.msra.mxu0 0.0
  %924 = vmatprep.subr.mxu0 0.0
  %925 = vmatpush1.msra.mxu0 0.0
  %926 = vmatprep.subr.mxu0 0.0
  %927 = vmatpush1.msra.mxu0 0.0
  %928 = vmatprep.subr.mxu0 0.0
  %929 = vmatpush1.msra.mxu0 0.0
  %930 = vmatprep.subr.mxu0 0.0
  %931 = vmatpush1.msra.mxu0 0.0
  %932 = vmatprep.subr.mxu0 0.0
  %933 = vmatpush1.msra.mxu0 %v829
  %934 = vmatprep.subr.mxu0 0.0
  %935 = vmatpush1.msra.mxu0 %v828
  %936 = vmatprep.subr.mxu0 0.0
  %937 = vmatpush1.msra.mxu0 %v827
  %938 = vmatprep.subr.mxu0 0.0
  %939 = vmatpush1.msra.mxu0 %v826
  %940 = vmatprep.subr.mxu0 0.0
  %941 = vmatpush1.msra.mxu0 %v825
  %942 = vmatprep.subr.mxu0 0.0
  %943 = vmatpush1.msra.mxu0 %v824
  %944 = vmatprep.subr.mxu0 0.0
  %945 = vmatpush1.msra.mxu0 %v823
  %946 = vmatprep.subr.mxu0 0.0
  %947 = vmatpush1.msra.mxu0 %v822
  %948 = vmatprep.subr.mxu0 0.0
  %949 = vmatpush2.msra.mxu0 0.0
  %950 = vmatprep.subr.mxu0 0.0
  %951 = vmatpush2.msra.mxu0 0.0
  %952 = vmatprep.subr.mxu0 0.0
  %953 = vmatpush2.msra.mxu0 0.0
  %954 = vmatprep.subr.mxu0 0.0
  %955 = vmatpush2.msra.mxu0 0.0
  %956 = vmatprep.subr.mxu0 0.0
  %957 = vmatpush2.msra.mxu0 0.0
  %958 = vmatprep.subr.mxu0 0.0
  %959 = vmatpush2.msra.mxu0 0.0
  %960 = vmatprep.subr.mxu0 0.0
  %961 = vmatpush2.msra.mxu0 0.0
  %962 = vmatprep.subr.mxu0 0.0
  %963 = vmatpush2.msra.mxu0 0.0
  %964 = vmatprep.subr.mxu0 0.0
  %965 = vmatpush2.msra.mxu0 0.0
  %966 = vmatprep.subr.mxu0 0.0
  %967 = vmatpush2.msra.mxu0 0.0
  %968 = vmatprep.subr.mxu0 0.0
  %969 = vmatpush2.msra.mxu0 0.0
  %970 = vmatprep.subr.mxu0 0.0
  %971 = vmatpush2.msra.mxu0 0.0
  %972 = vmatprep.subr.mxu0 0.0
  %973 = vmatpush2.msra.mxu0 0.0
  %974 = vmatprep.subr.mxu0 0.0
  %975 = vmatpush2.msra.mxu0 0.0
  %976 = vmatprep.subr.mxu0 0.0
  %977 = vmatpush2.msra.mxu0 0.0
  %978 = vmatprep.subr.mxu0 0.0
  %979 = vmatpush2.msra.mxu0 0.0
  %980 = vmatprep.mubr.f32.mxu0 0.0
  %981 = vmatmul.mubr.f32.gmra.mxu0 %v914
  %v982 = vpop.f32.mrf.mxu0
  %v983 = vadd.f32 %v910, %v982
  %v984 = vpop.f32.mrf.mxu0
  %985 = vdwg.mxu0
  %s986 = scalar_lea.vmem %s5, 128
  %v987 = vld [vmem:[%s986] sm:$0xff]
  %v988 = vld [vmem:[%s986 + $0x8] sm:$0xff]
  %v989 = vld [vmem:[%s986 + $0x10] sm:$0xff]
  %v990 = vld [vmem:[%s986 + $0x18] sm:$0xff]
  %v991 = vld [vmem:[%s986 + $0x20] sm:$0xff]
  %v992 = vld [vmem:[%s986 + $0x28] sm:$0xff]
  %v993 = vld [vmem:[%s986 + $0x30] sm:$0xff]
  %v994 = vld [vmem:[%s986 + $0x38] sm:$0xff]
  %v996 = vrot.slane %v783, 4
  %v997 = vsel %vm196, %v996, 0
  %999 = vmatprep.subr.mxu0 0.0
  %1000 = vmatpush1.msra.mxu0 0.0
  %1001 = vmatprep.subr.mxu0 0.0
  %1002 = vmatpush1.msra.mxu0 0.0
  %1003 = vmatprep.subr.mxu0 0.0
  %1004 = vmatpush1.msra.mxu0 0.0
  %1005 = vmatprep.subr.mxu0 0.0
  %1006 = vmatpush1.msra.mxu0 0.0
  %1007 = vmatprep.subr.mxu0 0.0
  %1008 = vmatpush1.msra.mxu0 0.0
  %1009 = vmatprep.subr.mxu0 0.0
  %1010 = vmatpush1.msra.mxu0 0.0
  %1011 = vmatprep.subr.mxu0 0.0
  %1012 = vmatpush1.msra.mxu0 0.0
  %1013 = vmatprep.subr.mxu0 0.0
  %1014 = vmatpush1.msra.mxu0 0.0
  %1015 = vmatprep.subr.mxu0 0.0
  %1016 = vmatpush1.msra.mxu0 %v994
  %1017 = vmatprep.subr.mxu0 0.0
  %1018 = vmatpush1.msra.mxu0 %v993
  %1019 = vmatprep.subr.mxu0 0.0
  %1020 = vmatpush1.msra.mxu0 %v992
  %1021 = vmatprep.subr.mxu0 0.0
  %1022 = vmatpush1.msra.mxu0 %v991
  %1023 = vmatprep.subr.mxu0 0.0
  %1024 = vmatpush1.msra.mxu0 %v990
  %1025 = vmatprep.subr.mxu0 0.0
  %1026 = vmatpush1.msra.mxu0 %v989
  %1027 = vmatprep.subr.mxu0 0.0
  %1028 = vmatpush1.msra.mxu0 %v988
  %1029 = vmatprep.subr.mxu0 0.0
  %1030 = vmatpush1.msra.mxu0 %v987
  %1031 = vmatprep.subr.mxu0 0.0
  %1032 = vmatpush2.msra.mxu0 0.0
  %1033 = vmatprep.subr.mxu0 0.0
  %1034 = vmatpush2.msra.mxu0 0.0
  %1035 = vmatprep.subr.mxu0 0.0
  %1036 = vmatpush2.msra.mxu0 0.0
  %1037 = vmatprep.subr.mxu0 0.0
  %1038 = vmatpush2.msra.mxu0 0.0
  %1039 = vmatprep.subr.mxu0 0.0
  %1040 = vmatpush2.msra.mxu0 0.0
  %1041 = vmatprep.subr.mxu0 0.0
  %1042 = vmatpush2.msra.mxu0 0.0
  %1043 = vmatprep.subr.mxu0 0.0
  %1044 = vmatpush2.msra.mxu0 0.0
  %1045 = vmatprep.subr.mxu0 0.0
  %1046 = vmatpush2.msra.mxu0 0.0
  %1047 = vmatprep.subr.mxu0 0.0
  %1048 = vmatpush2.msra.mxu0 0.0
  %1049 = vmatprep.subr.mxu0 0.0
  %1050 = vmatpush2.msra.mxu0 0.0
  %1051 = vmatprep.subr.mxu0 0.0
  %1052 = vmatpush2.msra.mxu0 0.0
  %1053 = vmatprep.subr.mxu0 0.0
  %1054 = vmatpush2.msra.mxu0 0.0
  %1055 = vmatprep.subr.mxu0 0.0
  %1056 = vmatpush2.msra.mxu0 0.0
  %1057 = vmatprep.subr.mxu0 0.0
  %1058 = vmatpush2.msra.mxu0 0.0
  %1059 = vmatprep.subr.mxu0 0.0
  %1060 = vmatpush2.msra.mxu0 0.0
  %1061 = vmatprep.subr.mxu0 0.0
  %1062 = vmatpush2.msra.mxu0 0.0
  %1063 = vmatprep.mubr.f32.mxu0 0.0
  %1064 = vmatmul.mubr.f32.gmra.mxu0 %v997
  %v1065 = vpop.f32.mrf.mxu0
  %v1066 = vadd.f32 0.0, %v1065
  %v1067 = vpop.f32.mrf.mxu0
  %1068 = vdwg.mxu0
  %v1069 = vadd.f32 %v983, %v1066
  %s1070 = scalar_lea.vmem %s5, 192
  %v1071 = vld [vmem:[%s1070] sm:$0xff]
  %v1072 = vld [vmem:[%s1070 + $0x8] sm:$0xff]
  %v1073 = vld [vmem:[%s1070 + $0x10] sm:$0xff]
  %v1074 = vld [vmem:[%s1070 + $0x18] sm:$0xff]
  %v1075 = vld [vmem:[%s1070 + $0x20] sm:$0xff]
  %v1076 = vld [vmem:[%s1070 + $0x28] sm:$0xff]
  %v1077 = vld [vmem:[%s1070 + $0x30] sm:$0xff]
  %v1078 = vld [vmem:[%s1070 + $0x38] sm:$0xff]
  %v1080 = vrot.slane %v787, 4
  %v1081 = vsel %vm196, %v1080, 0
  %1083 = vmatprep.subr.mxu0 0.0
  %1084 = vmatpush1.msra.mxu0 0.0
  %1085 = vmatprep.subr.mxu0 0.0
  %1086 = vmatpush1.msra.mxu0 0.0
  %1087 = vmatprep.subr.mxu0 0.0
  %1088 = vmatpush1.msra.mxu0 0.0
  %1089 = vmatprep.subr.mxu0 0.0
  %1090 = vmatpush1.msra.mxu0 0.0
  %1091 = vmatprep.subr.mxu0 0.0
  %1092 = vmatpush1.msra.mxu0 0.0
  %1093 = vmatprep.subr.mxu0 0.0
  %1094 = vmatpush1.msra.mxu0 0.0
  %1095 = vmatprep.subr.mxu0 0.0
  %1096 = vmatpush1.msra.mxu0 0.0
  %1097 = vmatprep.subr.mxu0 0.0
  %1098 = vmatpush1.msra.mxu0 0.0
  %1099 = vmatprep.subr.mxu0 0.0
  %1100 = vmatpush1.msra.mxu0 %v1078
  %1101 = vmatprep.subr.mxu0 0.0
  %1102 = vmatpush1.msra.mxu0 %v1077
  %1103 = vmatprep.subr.mxu0 0.0
  %1104 = vmatpush1.msra.mxu0 %v1076
  %1105 = vmatprep.subr.mxu0 0.0
  %1106 = vmatpush1.msra.mxu0 %v1075
  %1107 = vmatprep.subr.mxu0 0.0
  %1108 = vmatpush1.msra.mxu0 %v1074
  %1109 = vmatprep.subr.mxu0 0.0
  %1110 = vmatpush1.msra.mxu0 %v1073
  %1111 = vmatprep.subr.mxu0 0.0
  %1112 = vmatpush1.msra.mxu0 %v1072
  %1113 = vmatprep.subr.mxu0 0.0
  %1114 = vmatpush1.msra.mxu0 %v1071
  %1115 = vmatprep.subr.mxu0 0.0
  %1116 = vmatpush2.msra.mxu0 0.0
  %1117 = vmatprep.subr.mxu0 0.0
  %1118 = vmatpush2.msra.mxu0 0.0
  %1119 = vmatprep.subr.mxu0 0.0
  %1120 = vmatpush2.msra.mxu0 0.0
  %1121 = vmatprep.subr.mxu0 0.0
  %1122 = vmatpush2.msra.mxu0 0.0
  %1123 = vmatprep.subr.mxu0 0.0
  %1124 = vmatpush2.msra.mxu0 0.0
  %1125 = vmatprep.subr.mxu0 0.0
  %1126 = vmatpush2.msra.mxu0 0.0
  %1127 = vmatprep.subr.mxu0 0.0
  %1128 = vmatpush2.msra.mxu0 0.0
  %1129 = vmatprep.subr.mxu0 0.0
  %1130 = vmatpush2.msra.mxu0 0.0
  %1131 = vmatprep.subr.mxu0 0.0
  %1132 = vmatpush2.msra.mxu0 0.0
  %1133 = vmatprep.subr.mxu0 0.0
  %1134 = vmatpush2.msra.mxu0 0.0
  %1135 = vmatprep.subr.mxu0 0.0
  %1136 = vmatpush2.msra.mxu0 0.0
  %1137 = vmatprep.subr.mxu0 0.0
  %1138 = vmatpush2.msra.mxu0 0.0
  %1139 = vmatprep.subr.mxu0 0.0
  %1140 = vmatpush2.msra.mxu0 0.0
  %1141 = vmatprep.subr.mxu0 0.0
  %1142 = vmatpush2.msra.mxu0 0.0
  %1143 = vmatprep.subr.mxu0 0.0
  %1144 = vmatpush2.msra.mxu0 0.0
  %1145 = vmatprep.subr.mxu0 0.0
  %1146 = vmatpush2.msra.mxu0 0.0
  %1147 = vmatprep.mubr.f32.mxu0 0.0
  %1148 = vmatmul.mubr.f32.gmra.mxu0 %v1081
  %v1149 = vpop.f32.mrf.mxu0
  %v1150 = vadd.f32 0.0, %v1149
  %v1151 = vpop.f32.mrf.mxu0
  %1152 = vdwg.mxu0
  %v1153 = vadd.f32 %v1069, %v1150
  %s1154 = scalar_lea.vmem %s5, 256
  %v1155 = vld [vmem:[%s1154] sm:$0xff]
  %v1156 = vld [vmem:[%s1154 + $0x8] sm:$0xff]
  %v1157 = vld [vmem:[%s1154 + $0x10] sm:$0xff]
  %v1158 = vld [vmem:[%s1154 + $0x18] sm:$0xff]
  %v1159 = vld [vmem:[%s1154 + $0x20] sm:$0xff]
  %v1160 = vld [vmem:[%s1154 + $0x28] sm:$0xff]
  %v1161 = vld [vmem:[%s1154 + $0x30] sm:$0xff]
  %v1162 = vld [vmem:[%s1154 + $0x38] sm:$0xff]
  %v1164 = vsel %vm196, %v793, 0
  %1166 = vmatprep.subr.mxu0 0.0
  %1167 = vmatpush1.msra.mxu0 0.0
  %1168 = vmatprep.subr.mxu0 0.0
  %1169 = vmatpush1.msra.mxu0 0.0
  %1170 = vmatprep.subr.mxu0 0.0
  %1171 = vmatpush1.msra.mxu0 0.0
  %1172 = vmatprep.subr.mxu0 0.0
  %1173 = vmatpush1.msra.mxu0 0.0
  %1174 = vmatprep.subr.mxu0 0.0
  %1175 = vmatpush1.msra.mxu0 0.0
  %1176 = vmatprep.subr.mxu0 0.0
  %1177 = vmatpush1.msra.mxu0 0.0
  %1178 = vmatprep.subr.mxu0 0.0
  %1179 = vmatpush1.msra.mxu0 0.0
  %1180 = vmatprep.subr.mxu0 0.0
  %1181 = vmatpush1.msra.mxu0 0.0
  %1182 = vmatprep.subr.mxu0 0.0
  %1183 = vmatpush1.msra.mxu0 %v1162
  %1184 = vmatprep.subr.mxu0 0.0
  %1185 = vmatpush1.msra.mxu0 %v1161
  %1186 = vmatprep.subr.mxu0 0.0
  %1187 = vmatpush1.msra.mxu0 %v1160
  %1188 = vmatprep.subr.mxu0 0.0
  %1189 = vmatpush1.msra.mxu0 %v1159
  %1190 = vmatprep.subr.mxu0 0.0
  %1191 = vmatpush1.msra.mxu0 %v1158
  %1192 = vmatprep.subr.mxu0 0.0
  %1193 = vmatpush1.msra.mxu0 %v1157
  %1194 = vmatprep.subr.mxu0 0.0
  %1195 = vmatpush1.msra.mxu0 %v1156
  %1196 = vmatprep.subr.mxu0 0.0
  %1197 = vmatpush1.msra.mxu0 %v1155
  %1198 = vmatprep.subr.mxu0 0.0
  %1199 = vmatpush2.msra.mxu0 0.0
  %1200 = vmatprep.subr.mxu0 0.0
  %1201 = vmatpush2.msra.mxu0 0.0
  %1202 = vmatprep.subr.mxu0 0.0
  %1203 = vmatpush2.msra.mxu0 0.0
  %1204 = vmatprep.subr.mxu0 0.0
  %1205 = vmatpush2.msra.mxu0 0.0
  %1206 = vmatprep.subr.mxu0 0.0
  %1207 = vmatpush2.msra.mxu0 0.0
  %1208 = vmatprep.subr.mxu0 0.0
  %1209 = vmatpush2.msra.mxu0 0.0
  %1210 = vmatprep.subr.mxu0 0.0
  %1211 = vmatpush2.msra.mxu0 0.0
  %1212 = vmatprep.subr.mxu0 0.0
  %1213 = vmatpush2.msra.mxu0 0.0
  %1214 = vmatprep.subr.mxu0 0.0
  %1215 = vmatpush2.msra.mxu0 0.0
  %1216 = vmatprep.subr.mxu0 0.0
  %1217 = vmatpush2.msra.mxu0 0.0
  %1218 = vmatprep.subr.mxu0 0.0
  %1219 = vmatpush2.msra.mxu0 0.0
  %1220 = vmatprep.subr.mxu0 0.0
  %1221 = vmatpush2.msra.mxu0 0.0
  %1222 = vmatprep.subr.mxu0 0.0
  %1223 = vmatpush2.msra.mxu0 0.0
  %1224 = vmatprep.subr.mxu0 0.0
  %1225 = vmatpush2.msra.mxu0 0.0
  %1226 = vmatprep.subr.mxu0 0.0
  %1227 = vmatpush2.msra.mxu0 0.0
  %1228 = vmatprep.subr.mxu0 0.0
  %1229 = vmatpush2.msra.mxu0 0.0
  %1230 = vmatprep.mubr.f32.mxu0 0.0
  %1231 = vmatmul.mubr.f32.gmra.mxu0 %v1164
  %v1232 = vpop.f32.mrf.mxu0
  %v1233 = vadd.f32 0.0, %v1232
  %v1234 = vpop.f32.mrf.mxu0
  %1235 = vdwg.mxu0
  %v1236 = vadd.f32 %v1153, %v1233
  %s1237 = scalar_lea.vmem %s5, 320
  %v1238 = vld [vmem:[%s1237] sm:$0xff]
  %v1239 = vld [vmem:[%s1237 + $0x8] sm:$0xff]
  %v1240 = vld [vmem:[%s1237 + $0x10] sm:$0xff]
  %v1241 = vld [vmem:[%s1237 + $0x18] sm:$0xff]
  %v1242 = vld [vmem:[%s1237 + $0x20] sm:$0xff]
  %v1243 = vld [vmem:[%s1237 + $0x28] sm:$0xff]
  %v1244 = vld [vmem:[%s1237 + $0x30] sm:$0xff]
  %v1245 = vld [vmem:[%s1237 + $0x38] sm:$0xff]
  %v1247 = vsel %vm196, %v802, 0
  %1249 = vmatprep.subr.mxu0 0.0
  %1250 = vmatpush1.msra.mxu0 0.0
  %1251 = vmatprep.subr.mxu0 0.0
  %1252 = vmatpush1.msra.mxu0 0.0
  %1253 = vmatprep.subr.mxu0 0.0
  %1254 = vmatpush1.msra.mxu0 0.0
  %1255 = vmatprep.subr.mxu0 0.0
  %1256 = vmatpush1.msra.mxu0 0.0
  %1257 = vmatprep.subr.mxu0 0.0
  %1258 = vmatpush1.msra.mxu0 0.0
  %1259 = vmatprep.subr.mxu0 0.0
  %1260 = vmatpush1.msra.mxu0 0.0
  %1261 = vmatprep.subr.mxu0 0.0
  %1262 = vmatpush1.msra.mxu0 0.0
  %1263 = vmatprep.subr.mxu0 0.0
  %1264 = vmatpush1.msra.mxu0 0.0
  %1265 = vmatprep.subr.mxu0 0.0
  %1266 = vmatpush1.msra.mxu0 %v1245
  %1267 = vmatprep.subr.mxu0 0.0
  %1268 = vmatpush1.msra.mxu0 %v1244
  %1269 = vmatprep.subr.mxu0 0.0
  %1270 = vmatpush1.msra.mxu0 %v1243
  %1271 = vmatprep.subr.mxu0 0.0
  %1272 = vmatpush1.msra.mxu0 %v1242
  %1273 = vmatprep.subr.mxu0 0.0
  %1274 = vmatpush1.msra.mxu0 %v1241
  %1275 = vmatprep.subr.mxu0 0.0
  %1276 = vmatpush1.msra.mxu0 %v1240
  %1277 = vmatprep.subr.mxu0 0.0
  %1278 = vmatpush1.msra.mxu0 %v1239
  %1279 = vmatprep.subr.mxu0 0.0
  %1280 = vmatpush1.msra.mxu0 %v1238
  %1281 = vmatprep.subr.mxu0 0.0
  %1282 = vmatpush2.msra.mxu0 0.0
  %1283 = vmatprep.subr.mxu0 0.0
  %1284 = vmatpush2.msra.mxu0 0.0
  %1285 = vmatprep.subr.mxu0 0.0
  %1286 = vmatpush2.msra.mxu0 0.0
  %1287 = vmatprep.subr.mxu0 0.0
  %1288 = vmatpush2.msra.mxu0 0.0
  %1289 = vmatprep.subr.mxu0 0.0
  %1290 = vmatpush2.msra.mxu0 0.0
  %1291 = vmatprep.subr.mxu0 0.0
  %1292 = vmatpush2.msra.mxu0 0.0
  %1293 = vmatprep.subr.mxu0 0.0
  %1294 = vmatpush2.msra.mxu0 0.0
  %1295 = vmatprep.subr.mxu0 0.0
  %1296 = vmatpush2.msra.mxu0 0.0
  %1297 = vmatprep.subr.mxu0 0.0
  %1298 = vmatpush2.msra.mxu0 0.0
  %1299 = vmatprep.subr.mxu0 0.0
  %1300 = vmatpush2.msra.mxu0 0.0
  %1301 = vmatprep.subr.mxu0 0.0
  %1302 = vmatpush2.msra.mxu0 0.0
  %1303 = vmatprep.subr.mxu0 0.0
  %1304 = vmatpush2.msra.mxu0 0.0
  %1305 = vmatprep.subr.mxu0 0.0
  %1306 = vmatpush2.msra.mxu0 0.0
  %1307 = vmatprep.subr.mxu0 0.0
  %1308 = vmatpush2.msra.mxu0 0.0
  %1309 = vmatprep.subr.mxu0 0.0
  %1310 = vmatpush2.msra.mxu0 0.0
  %1311 = vmatprep.subr.mxu0 0.0
  %1312 = vmatpush2.msra.mxu0 0.0
  %1313 = vmatprep.mubr.f32.mxu0 0.0
  %1314 = vmatmul.mubr.f32.gmra.mxu0 %v1247
  %v1315 = vpop.f32.mrf.mxu0
  %v1316 = vadd.f32 0.0, %v1315
  %v1317 = vpop.f32.mrf.mxu0
  %1318 = vdwg.mxu0
  %v1319 = vadd.f32 %v1236, %v1316
  %s1320 = scalar_lea.vmem %s5, 384
  %v1321 = vld [vmem:[%s1320] sm:$0xff]
  %v1322 = vld [vmem:[%s1320 + $0x8] sm:$0xff]
  %v1323 = vld [vmem:[%s1320 + $0x10] sm:$0xff]
  %v1324 = vld [vmem:[%s1320 + $0x18] sm:$0xff]
  %v1325 = vld [vmem:[%s1320 + $0x20] sm:$0xff]
  %v1326 = vld [vmem:[%s1320 + $0x28] sm:$0xff]
  %v1327 = vld [vmem:[%s1320 + $0x30] sm:$0xff]
  %v1328 = vld [vmem:[%s1320 + $0x38] sm:$0xff]
  %v1330 = vrot.slane %v806, 4
  %v1331 = vsel %vm196, %v1330, 0
  %1333 = vmatprep.subr.mxu0 0.0
  %1334 = vmatpush1.msra.mxu0 0.0
  %1335 = vmatprep.subr.mxu0 0.0
  %1336 = vmatpush1.msra.mxu0 0.0
  %1337 = vmatprep.subr.mxu0 0.0
  %1338 = vmatpush1.msra.mxu0 0.0
  %1339 = vmatprep.subr.mxu0 0.0
  %1340 = vmatpush1.msra.mxu0 0.0
  %1341 = vmatprep.subr.mxu0 0.0
  %1342 = vmatpush1.msra.mxu0 0.0
  %1343 = vmatprep.subr.mxu0 0.0
  %1344 = vmatpush1.msra.mxu0 0.0
  %1345 = vmatprep.subr.mxu0 0.0
  %1346 = vmatpush1.msra.mxu0 0.0
  %1347 = vmatprep.subr.mxu0 0.0
  %1348 = vmatpush1.msra.mxu0 0.0
  %1349 = vmatprep.subr.mxu0 0.0
  %1350 = vmatpush1.msra.mxu0 %v1328
  %1351 = vmatprep.subr.mxu0 0.0
  %1352 = vmatpush1.msra.mxu0 %v1327
  %1353 = vmatprep.subr.mxu0 0.0
  %1354 = vmatpush1.msra.mxu0 %v1326
  %1355 = vmatprep.subr.mxu0 0.0
  %1356 = vmatpush1.msra.mxu0 %v1325
  %1357 = vmatprep.subr.mxu0 0.0
  %1358 = vmatpush1.msra.mxu0 %v1324
  %1359 = vmatprep.subr.mxu0 0.0
  %1360 = vmatpush1.msra.mxu0 %v1323
  %1361 = vmatprep.subr.mxu0 0.0
  %1362 = vmatpush1.msra.mxu0 %v1322
  %1363 = vmatprep.subr.mxu0 0.0
  %1364 = vmatpush1.msra.mxu0 %v1321
  %1365 = vmatprep.subr.mxu0 0.0
  %1366 = vmatpush2.msra.mxu0 0.0
  %1367 = vmatprep.subr.mxu0 0.0
  %1368 = vmatpush2.msra.mxu0 0.0
  %1369 = vmatprep.subr.mxu0 0.0
  %1370 = vmatpush2.msra.mxu0 0.0
  %1371 = vmatprep.subr.mxu0 0.0
  %1372 = vmatpush2.msra.mxu0 0.0
  %1373 = vmatprep.subr.mxu0 0.0
  %1374 = vmatpush2.msra.mxu0 0.0
  %1375 = vmatprep.subr.mxu0 0.0
  %1376 = vmatpush2.msra.mxu0 0.0
  %1377 = vmatprep.subr.mxu0 0.0
  %1378 = vmatpush2.msra.mxu0 0.0
  %1379 = vmatprep.subr.mxu0 0.0
  %1380 = vmatpush2.msra.mxu0 0.0
  %1381 = vmatprep.subr.mxu0 0.0
  %1382 = vmatpush2.msra.mxu0 0.0
  %1383 = vmatprep.subr.mxu0 0.0
  %1384 = vmatpush2.msra.mxu0 0.0
  %1385 = vmatprep.subr.mxu0 0.0
  %1386 = vmatpush2.msra.mxu0 0.0
  %1387 = vmatprep.subr.mxu0 0.0
  %1388 = vmatpush2.msra.mxu0 0.0
  %1389 = vmatprep.subr.mxu0 0.0
  %1390 = vmatpush2.msra.mxu0 0.0
  %1391 = vmatprep.subr.mxu0 0.0
  %1392 = vmatpush2.msra.mxu0 0.0
  %1393 = vmatprep.subr.mxu0 0.0
  %1394 = vmatpush2.msra.mxu0 0.0
  %1395 = vmatprep.subr.mxu0 0.0
  %1396 = vmatpush2.msra.mxu0 0.0
  %1397 = vmatprep.mubr.f32.mxu0 0.0
  %1398 = vmatmul.mubr.f32.gmra.mxu0 %v1331
  %v1399 = vpop.f32.mrf.mxu0
  %v1400 = vadd.f32 0.0, %v1399
  %v1401 = vpop.f32.mrf.mxu0
  %1402 = vdwg.mxu0
  %v1403 = vadd.f32 %v1319, %v1400
  %s1404 = scalar_lea.vmem %s5, 448
  %v1405 = vld [vmem:[%s1404] sm:$0xff]
  %v1406 = vld [vmem:[%s1404 + $0x8] sm:$0xff]
  %v1407 = vld [vmem:[%s1404 + $0x10] sm:$0xff]
  %v1408 = vld [vmem:[%s1404 + $0x18] sm:$0xff]
  %v1409 = vld [vmem:[%s1404 + $0x20] sm:$0xff]
  %v1410 = vld [vmem:[%s1404 + $0x28] sm:$0xff]
  %v1411 = vld [vmem:[%s1404 + $0x30] sm:$0xff]
  %v1412 = vld [vmem:[%s1404 + $0x38] sm:$0xff]
  %v1414 = vsel %vm196, %v812, 0
  %1416 = vmatprep.subr.mxu0 0.0
  %1417 = vmatpush1.msra.mxu0 0.0
  %1418 = vmatprep.subr.mxu0 0.0
  %1419 = vmatpush1.msra.mxu0 0.0
  %1420 = vmatprep.subr.mxu0 0.0
  %1421 = vmatpush1.msra.mxu0 0.0
  %1422 = vmatprep.subr.mxu0 0.0
  %1423 = vmatpush1.msra.mxu0 0.0
  %1424 = vmatprep.subr.mxu0 0.0
  %1425 = vmatpush1.msra.mxu0 0.0
  %1426 = vmatprep.subr.mxu0 0.0
  %1427 = vmatpush1.msra.mxu0 0.0
  %1428 = vmatprep.subr.mxu0 0.0
  %1429 = vmatpush1.msra.mxu0 0.0
  %1430 = vmatprep.subr.mxu0 0.0
  %1431 = vmatpush1.msra.mxu0 0.0
  %1432 = vmatprep.subr.mxu0 0.0
  %1433 = vmatpush1.msra.mxu0 %v1412
  %1434 = vmatprep.subr.mxu0 0.0
  %1435 = vmatpush1.msra.mxu0 %v1411
  %1436 = vmatprep.subr.mxu0 0.0
  %1437 = vmatpush1.msra.mxu0 %v1410
  %1438 = vmatprep.subr.mxu0 0.0
  %1439 = vmatpush1.msra.mxu0 %v1409
  %1440 = vmatprep.subr.mxu0 0.0
  %1441 = vmatpush1.msra.mxu0 %v1408
  %1442 = vmatprep.subr.mxu0 0.0
  %1443 = vmatpush1.msra.mxu0 %v1407
  %1444 = vmatprep.subr.mxu0 0.0
  %1445 = vmatpush1.msra.mxu0 %v1406
  %1446 = vmatprep.subr.mxu0 0.0
  %1447 = vmatpush1.msra.mxu0 %v1405
  %1448 = vmatprep.subr.mxu0 0.0
  %1449 = vmatpush2.msra.mxu0 0.0
  %1450 = vmatprep.subr.mxu0 0.0
  %1451 = vmatpush2.msra.mxu0 0.0
  %1452 = vmatprep.subr.mxu0 0.0
  %1453 = vmatpush2.msra.mxu0 0.0
  %1454 = vmatprep.subr.mxu0 0.0
  %1455 = vmatpush2.msra.mxu0 0.0
  %1456 = vmatprep.subr.mxu0 0.0
  %1457 = vmatpush2.msra.mxu0 0.0
  %1458 = vmatprep.subr.mxu0 0.0
  %1459 = vmatpush2.msra.mxu0 0.0
  %1460 = vmatprep.subr.mxu0 0.0
  %1461 = vmatpush2.msra.mxu0 0.0
  %1462 = vmatprep.subr.mxu0 0.0
  %1463 = vmatpush2.msra.mxu0 0.0
  %1464 = vmatprep.subr.mxu0 0.0
  %1465 = vmatpush2.msra.mxu0 0.0
  %1466 = vmatprep.subr.mxu0 0.0
  %1467 = vmatpush2.msra.mxu0 0.0
  %1468 = vmatprep.subr.mxu0 0.0
  %1469 = vmatpush2.msra.mxu0 0.0
  %1470 = vmatprep.subr.mxu0 0.0
  %1471 = vmatpush2.msra.mxu0 0.0
  %1472 = vmatprep.subr.mxu0 0.0
  %1473 = vmatpush2.msra.mxu0 0.0
  %1474 = vmatprep.subr.mxu0 0.0
  %1475 = vmatpush2.msra.mxu0 0.0
  %1476 = vmatprep.subr.mxu0 0.0
  %1477 = vmatpush2.msra.mxu0 0.0
  %1478 = vmatprep.subr.mxu0 0.0
  %1479 = vmatpush2.msra.mxu0 0.0
  %1480 = vmatprep.mubr.f32.mxu0 0.0
  %1481 = vmatmul.mubr.f32.gmra.mxu0 %v1414
  %v1482 = vpop.f32.mrf.mxu0
  %v1483 = vadd.f32 0.0, %v1482
  %v1484 = vpop.f32.mrf.mxu0
  %1485 = vdwg.mxu0
  %v1486 = vadd.f32 %v1403, %v1483
  %s1487 = scalar_lea.vmem %s5, 512
  %v1488 = vld [vmem:[%s1487] sm:$0xff]
  %v1489 = vld [vmem:[%s1487 + $0x8] sm:$0xff]
  %v1490 = vld [vmem:[%s1487 + $0x10] sm:$0xff]
  %v1491 = vld [vmem:[%s1487 + $0x18] sm:$0xff]
  %v1492 = vld [vmem:[%s1487 + $0x20] sm:$0xff]
  %v1493 = vld [vmem:[%s1487 + $0x28] sm:$0xff]
  %v1494 = vld [vmem:[%s1487 + $0x30] sm:$0xff]
  %v1495 = vld [vmem:[%s1487 + $0x38] sm:$0xff]
  %v1497 = vsel %vm196, %v821, 0
  %1499 = vmatprep.subr.mxu0 0.0
  %1500 = vmatpush1.msra.mxu0 0.0
  %1501 = vmatprep.subr.mxu0 0.0
  %1502 = vmatpush1.msra.mxu0 0.0
  %1503 = vmatprep.subr.mxu0 0.0
  %1504 = vmatpush1.msra.mxu0 0.0
  %1505 = vmatprep.subr.mxu0 0.0
  %1506 = vmatpush1.msra.mxu0 0.0
  %1507 = vmatprep.subr.mxu0 0.0
  %1508 = vmatpush1.msra.mxu0 0.0
  %1509 = vmatprep.subr.mxu0 0.0
  %1510 = vmatpush1.msra.mxu0 0.0
  %1511 = vmatprep.subr.mxu0 0.0
  %1512 = vmatpush1.msra.mxu0 0.0
  %1513 = vmatprep.subr.mxu0 0.0
  %1514 = vmatpush1.msra.mxu0 0.0
  %1515 = vmatprep.subr.mxu0 0.0
  %1516 = vmatpush1.msra.mxu0 %v1495
  %1517 = vmatprep.subr.mxu0 0.0
  %1518 = vmatpush1.msra.mxu0 %v1494
  %1519 = vmatprep.subr.mxu0 0.0
  %1520 = vmatpush1.msra.mxu0 %v1493
  %1521 = vmatprep.subr.mxu0 0.0
  %1522 = vmatpush1.msra.mxu0 %v1492
  %1523 = vmatprep.subr.mxu0 0.0
  %1524 = vmatpush1.msra.mxu0 %v1491
  %1525 = vmatprep.subr.mxu0 0.0
  %1526 = vmatpush1.msra.mxu0 %v1490
  %1527 = vmatprep.subr.mxu0 0.0
  %1528 = vmatpush1.msra.mxu0 %v1489
  %1529 = vmatprep.subr.mxu0 0.0
  %1530 = vmatpush1.msra.mxu0 %v1488
  %1531 = vmatprep.subr.mxu0 0.0
  %1532 = vmatpush2.msra.mxu0 0.0
  %1533 = vmatprep.subr.mxu0 0.0
  %1534 = vmatpush2.msra.mxu0 0.0
  %1535 = vmatprep.subr.mxu0 0.0
  %1536 = vmatpush2.msra.mxu0 0.0
  %1537 = vmatprep.subr.mxu0 0.0
  %1538 = vmatpush2.msra.mxu0 0.0
  %1539 = vmatprep.subr.mxu0 0.0
  %1540 = vmatpush2.msra.mxu0 0.0
  %1541 = vmatprep.subr.mxu0 0.0
  %1542 = vmatpush2.msra.mxu0 0.0
  %1543 = vmatprep.subr.mxu0 0.0
  %1544 = vmatpush2.msra.mxu0 0.0
  %1545 = vmatprep.subr.mxu0 0.0
  %1546 = vmatpush2.msra.mxu0 0.0
  %1547 = vmatprep.subr.mxu0 0.0
  %1548 = vmatpush2.msra.mxu0 0.0
  %1549 = vmatprep.subr.mxu0 0.0
  %1550 = vmatpush2.msra.mxu0 0.0
  %1551 = vmatprep.subr.mxu0 0.0
  %1552 = vmatpush2.msra.mxu0 0.0
  %1553 = vmatprep.subr.mxu0 0.0
  %1554 = vmatpush2.msra.mxu0 0.0
  %1555 = vmatprep.subr.mxu0 0.0
  %1556 = vmatpush2.msra.mxu0 0.0
  %1557 = vmatprep.subr.mxu0 0.0
  %1558 = vmatpush2.msra.mxu0 0.0
  %1559 = vmatprep.subr.mxu0 0.0
  %1560 = vmatpush2.msra.mxu0 0.0
  %1561 = vmatprep.subr.mxu0 0.0
  %1562 = vmatpush2.msra.mxu0 0.0
  %1563 = vmatprep.mubr.f32.mxu0 0.0
  %1564 = vmatmul.mubr.f32.gmra.mxu0 %v1497
  %v1565 = vpop.f32.mrf.mxu0
  %v1566 = vadd.f32 0.0, %v1565
  %v1567 = vpop.f32.mrf.mxu0
  %1568 = vdwg.mxu0
  %v1569 = vadd.f32 %v1486, %v1566
  %v1570 = vld [vmem:[#allocation2] sm:$0x1]
  %v1572 = vlaneseq
  %v1573 = vshrl.u32 %v1572, 7
  %v1574 = vsub.s32 0, %v1573
  %v1575 = vrot.slane %v1570, %v1574
  %1576 = vset.pattern.permute.xlu0 0
  %1577 = vperm.xlu0 %1576, %v1575
  %v1578 = vpop.permute.xlu0 %1577
  %v1580 = vadd.f32 %v1569, %v1578
  %vm1581 = vcmask 68608
  %v1582 = vsel %vm1581, %v1580, 0.0
  %1583 = vadd.xlane.f32.xlu0 %v1582
  %v1584 = vpop.xlane.xlu0 %1583
  %vm1585 = vcmask 1043456
  %v1586 = vsel %vm1585, %v1584, 0.0
  %v1587 = vrot.slane %v1586, 4
  %v1588 = vadd.f32 %v1586, %v1587
  %v1589 = vrot.slane %v1588, 2
  %v1590 = vadd.f32 %v1588, %v1589
  %v1591 = vrot.slane %v1590, 1
  %v1592 = vadd.f32 %v1590, %v1591
  %v1593 = vrcp.pop 36.0
  %v1594 = vmul.f32 %v1592, %v1593
  %v1595 = vsub.f32 %v1580, %v1594
  %v1596 = vmul.f32 %v1595, %v1595
  %v1597 = vsel %vm1581, %v1596, 0.0
  %1598 = vadd.xlane.f32.xlu0 %v1597
  %v1599 = vpop.xlane.xlu0 %1598
  %v1600 = vsel %vm1585, %v1599, 0.0
  %v1601 = vrot.slane %v1600, 4
  %v1602 = vadd.f32 %v1600, %v1601
  %v1603 = vrot.slane %v1602, 2
  %v1604 = vadd.f32 %v1602, %v1603
  %v1605 = vrot.slane %v1604, 1
  %v1606 = vadd.f32 %v1604, %v1605
  %v1607 = vmul.f32 %v1606, %v1593
  %v1608 = vld [vmem:[#allocation3] sm:$0x1]
  %v1609 = vadd.f32 %v1607, 1e-05
  %v1610 = vrsqrt.pop %v1609
  %v1611 = vmul.f32 %v1608, %v1610
  %v1612 = vld [vmem:[#allocation4] sm:$0x1]
  %v1613 = vmul.f32 %v1594, %v1611
  %v1614 = vsub.f32 %v1612, %v1613
  %v1616 = vlaneseq
  %v1617 = vshrl.u32 %v1616, 7
  %v1618 = vsub.s32 0, %v1617
  %v1619 = vrot.slane %v1611, %v1618
  %1620 = vset.pattern.permute.xlu0 0
  %1621 = vperm.xlu0 %1620, %v1619
  %v1622 = vpop.permute.xlu0 %1621
  %v1624 = vmul.f32 %v1580, %v1622
  %v1626 = vlaneseq
  %v1627 = vshrl.u32 %v1626, 7
  %v1628 = vsub.s32 0, %v1627
  %v1629 = vrot.slane %v1614, %v1628
  %1630 = vset.pattern.permute.xlu0 0
  %1631 = vperm.xlu0 %1630, %v1629
  %v1632 = vpop.permute.xlu0 %1631
  %v1634 = vadd.f32 %v1624, %v1632
  %v1635 = vmax.f32 %v1634, 0.0
  %1637 = vrot.lane.b32.xlu0 %v1635, 127
  %v1638 = vpop.permute.xlu0 %1637
  %v1640 = vmax.f32 %v1635, %v1638
  %1641 = vrot.lane.b32.xlu0 %v1635, 125
  %v1642 = vpop.permute.xlu0 %1641
  %v1644 = vmax.f32 %v1635, %v1642
  %1646 = vrot.lane.b32.xlu0 %v1640, 125
  %v1647 = vpop.permute.xlu0 %1646
  %v1649 = vmax.f32 %v1640, %v1647
  %v1650 = vld [vmem:[%s9] sm:$0xf]
  %1651 = vset.pattern.permute.xlu0 0
  %1652 = vperm.xlu0 %1651, %v1635
  %v1653 = vpop.permute.xlu0 %1652
  %v1655 = vlaneseq
  %v1656 = vshrl.u32 %v1655, 7
  %v1657 = vsub.s32 0, %v1656
  %v1658 = vrot.slane %v1650, %v1657
  %v1659 = vmul.f32 %v1653, %v1658
  %1660 = vset.pattern.permute.xlu0 1
  %1661 = vperm.xlu0 %1660, %v1640
  %v1662 = vpop.permute.xlu0 %1661
  %v1664 = vlaneseq
  %v1665 = vshrl.u32 %v1664, 7
  %v1666 = vsub.s32 1, %v1665
  %v1667 = vrot.slane %v1650, %v1666
  %v1668 = vmul.f32 %v1662, %v1667
  %v1669 = vadd.f32 %v1659, %v1668
  %1671 = vset.pattern.permute.xlu0 3
  %1672 = vperm.xlu0 %1671, %v1644
  %v1673 = vpop.permute.xlu0 %1672
  %v1675 = vlaneseq
  %v1676 = vshrl.u32 %v1675, 7
  %v1677 = vsub.s32 2, %v1676
  %v1678 = vrot.slane %v1650, %v1677
  %v1679 = vmul.f32 %v1673, %v1678
  %v1680 = vadd.f32 %v1669, %v1679
  %1682 = vset.pattern.permute.xlu0 4
  %1683 = vperm.xlu0 %1682, %v1649
  %v1684 = vpop.permute.xlu0 %1683
  %v1686 = vlaneseq
  %v1687 = vshrl.u32 %v1686, 7
  %v1688 = vsub.s32 3, %v1687
  %v1689 = vrot.slane %v1650, %v1688
  %v1690 = vmul.f32 %v1684, %v1689
  %v1691 = vadd.f32 %v1680, %v1690
  %v1692 = vld [vmem:[%s10] sm:$0x1]
  %v1694 = vlaneseq
  %v1695 = vshrl.u32 %v1694, 7
  %v1696 = vsub.s32 0, %v1695
  %v1697 = vrot.slane %v1692, %v1696
  %v1699 = vadd.f32 %v1691, %v1697
  %v1700 = vmax.f32 %v1699, 0.0
  %v1701 = vld [vmem:[%s11] sm:$0x1]
  %v1703 = vlaneseq
  %v1704 = vshrl.u32 %v1703, 7
  %v1705 = vsub.s32 0, %v1704
  %v1706 = vrot.slane %v1701, %v1705
  %v1708 = vmul.f32 %v1700, %v1706
  %vm1709 = vcmask 60416
  %v1710 = vsel %vm1709, %v1708, 0.0
  %1711 = vadd.xlane.f32.xlu0 %v1710
  %v1712 = vpop.xlane.xlu0 %1711
  %v1713 = vld [vmem:[#allocation5] sm:$0x1]
  %v1715 = vlaneseq
  %v1716 = vshrl.u32 %v1715, 7
  %v1717 = vsub.s32 0, %v1716
  %v1718 = vrot.slane %v1713, %v1717
  %v1720 = vadd.f32 %v1712, %v1718
  %vm1721 = vcmask 3072
  %1722 = vst.msk [vmem:[%s13] sm:$0xf] %vm1721, %v1720
  // Predicated region
  $region54: #{relation_network_forward.1} parent=0 // pred_check
    _
  $region55: #{relation_network_forward.1} parent=0 // pred_check_branch
    %1724 = sbr.rel (0) target = $region57
  $region56: #{relation_network_forward.1} parent=0 // pred_region
    _
  $region57: #{relation_network_forward.1} parent=0 // pred_fallthru
    _
  // Predicated region
  $region58: #{relation_network_forward.1} parent=0 // pred_check
    _
  $region59: #{relation_network_forward.1} parent=0 // pred_check_branch
    %1726 = sbr.rel (0) target = $region61
  $region60: #{relation_network_forward.1} parent=0 // pred_region
    _
  $region61: #{relation_network_forward.1} parent=0 // pred_fallthru
    _

</llo_original>
